<compile_context>
chip_gen: v7x
topology: tpu7x:2x2x1
jax: 0.10.0
libtpu: 0.0.40
codegen_flags: <defaults>
</compile_context>

<pallas_src>
import jax
import jax.numpy as jnp
from jax.experimental import pallas as pl
from jax.experimental.pallas import tpu as pltpu


def _l_spa_kernel(ah_ref, bw_ref, org_ref, enh_ref, e_ref):
    # ah_ref:  (HP, H)  one-hot row-pooling matrix (resident, constant index)
    # bw_ref:  (W, WP)  one-hot col-pooling matrix (resident, constant index)
    # org_ref, enh_ref: (TB, C, H, W) blocks (TB images per grid step)
    # e_ref:   (TB, 1, HP, WP) output block
    tb, c, h, w = org_ref.shape
    hp = ah_ref.shape[0]
    wp = bw_ref.shape[1]
    inv = 1.0 / (16.0 * c)  # mean over C channels and 4x4 window

    ah = ah_ref[...]
    bw = bw_ref[...]

    # border masks for the zero-padded neighbour differences
    col = jax.lax.broadcasted_iota(jnp.int32, (hp, wp), 1)
    row = jax.lax.broadcasted_iota(jnp.int32, (hp, wp), 0)

    for i in range(tb):
        # channel-summed difference sum_c(org - enh), shape (H, W), f32 accum
        d = org_ref[i, 0].astype(jnp.float32) - enh_ref[i, 0].astype(jnp.float32)
        for ch in range(1, c):
            d = d + (org_ref[i, ch].astype(jnp.float32)
                     - enh_ref[i, ch].astype(jnp.float32))

        # 4x4 average pooling via two small MXU matmuls; reduce H (sublane)
        # first so the big W contraction happens on the shrunken (HP, W) matrix
        dh = jnp.dot(ah, d, preferred_element_type=jnp.float32)        # (HP, W)
        diff = jnp.dot(dh, bw, preferred_element_type=jnp.float32) * inv  # (HP, WP)

        # four zero-padded neighbour maps (== the four 3x3 difference convs,
        # applied to org_pool - enhance_pool by linearity). pltpu.roll follows
        # jnp.roll semantics: roll(x, 1)[j] == x[j-1]; border values masked to 0.
        left  = jnp.where(col == 0,      0.0, pltpu.roll(diff, 1,      axis=1))
        right = jnp.where(col == wp - 1, 0.0, pltpu.roll(diff, wp - 1, axis=1))
        up    = jnp.where(row == 0,      0.0, pltpu.roll(diff, 1,      axis=0))
        down  = jnp.where(row == hp - 1, 0.0, pltpu.roll(diff, hp - 1, axis=0))

        dl = diff - left
        dr = diff - right
        du = diff - up
        dd = diff - down
        e_ref[i, 0] = (dl * dl + dr * dr + du * du + dd * dd).astype(e_ref.dtype)


def _pick_images_per_step(batch, per_image_bytes, budget_bytes=4 << 20):
    """Largest batch divisor whose per-step input bytes fit the budget while
    keeping >= 2 grid steps (so a v7x megacore can split the batch axis)."""
    best = 1
    for cand in range(1, batch + 1):
        if batch % cand:
            continue
        if cand * per_image_bytes > budget_bytes:
            continue
        if batch >= 2 and batch // cand < 2:
            continue
        best = cand
    return best


def l_spa(org, enhance, *, images_per_step=None, vmem_limit_bytes=None):
    """Pallas implementation of L_spa.forward. org, enhance: (b, c, h, w)."""
    assert org.shape == enhance.shape, "org and enhance must share a shape"
    b, c, h, w = org.shape
    assert h % 4 == 0 and w % 4 == 0, "H and W must be divisible by 4 (AvgPool2d(4))"
    hp, wp = h // 4, w // 4

    if images_per_step is None:
        per_image_bytes = 2 * c * h * w * jnp.dtype(org.dtype).itemsize
        images_per_step = _pick_images_per_step(b, per_image_bytes)
    tb = images_per_step
    assert b % tb == 0, "batch must be divisible by images_per_step"

    # One-hot pooling matrices, built once on the host (hoisted out of the body):
    #   ah[p, i] = 1 if i // 4 == p ;   bw[j, q] = 1 if j // 4 == q
    ah = (jnp.arange(h, dtype=jnp.int32)[None, :] // 4
          == jnp.arange(hp, dtype=jnp.int32)[:, None]).astype(jnp.float32)   # (hp, h)
    bw = (jnp.arange(w, dtype=jnp.int32)[:, None] // 4
          == jnp.arange(wp, dtype=jnp.int32)[None, :]).astype(jnp.float32)   # (w, wp)

    img_spec = pl.BlockSpec((tb, c, h, w), lambda i: (i, 0, 0, 0))
    ah_spec = pl.BlockSpec((hp, h), lambda i: (0, 0))   # constant -> stays resident
    bw_spec = pl.BlockSpec((w, wp), lambda i: (0, 0))

    return pl.pallas_call(
        _l_spa_kernel,
        out_shape=jax.ShapeDtypeStruct((b, 1, hp, wp), jnp.float32),
        grid_spec=pltpu.PrefetchScalarGridSpec(
            num_scalar_prefetch=0,
            grid=(b // tb,),
            in_specs=[ah_spec, bw_spec, img_spec, img_spec],
            out_specs=pl.BlockSpec((tb, 1, hp, wp), lambda i: (i, 0, 0, 0)),
        ),
        compiler_params=pltpu.CompilerParams(
            # per-image-group partial outputs, no cross-iteration carry
            dimension_semantics=("parallel",),
            vmem_limit_bytes=vmem_limit_bytes,
        ),
    )(ah, bw, org, enhance)


# ---------------------------- pure-JAX reference -----------------------------
def _l_spa_ref(org, enhance):
    org_mean = jnp.mean(org, axis=1, keepdims=True)
    enh_mean = jnp.mean(enhance, axis=1, keepdims=True)

    def pool4(x):
        b, c, h, w = x.shape
        return x.reshape(b, c, h // 4, 4, w // 4, 4).mean(axis=(3, 5))

    org_pool = pool4(org_mean)
    enh_pool = pool4(enh_mean)

    def k(mat):
        return jnp.asarray(mat, jnp.float32).reshape(1, 1, 3, 3)

    kernels = [
        k([[0, 0, 0], [-1, 1, 0], [0, 0, 0]]),   # left
        k([[0, 0, 0], [0, 1, -1], [0, 0, 0]]),   # right
        k([[0, -1, 0], [0, 1, 0], [0, 0, 0]]),   # up
        k([[0, 0, 0], [0, 1, 0], [0, -1, 0]]),   # down
    ]

    def conv(x, wgt):
        return jax.lax.conv_general_dilated(
            x, wgt, window_strides=(1, 1), padding=((1, 1), (1, 1)),
            dimension_numbers=("NCHW", "OIHW", "NCHW"))

    e = jnp.zeros_like(org_pool)
    for wgt in kernels:
        e = e + (conv(org_pool, wgt) - conv(enh_pool, wgt)) ** 2
    return e


if __name__ == "__main__":
    key = jax.random.PRNGKey(0)
    k1, k2 = jax.random.split(key)
    # Small NCHW demo images. W=512 makes the pooled output a lane-dense
    # (8, 128) tile; b=4 lets the wrapper batch 2 images per grid step while
    # keeping 2 parallel steps for megacore.
    org = jax.random.uniform(k1, (4, 3, 32, 512), dtype=jnp.float32)
    enh = jax.random.uniform(k2, (4, 3, 32, 512), dtype=jnp.float32)

    out = jax.block_until_ready(l_spa(org, enh))
    ref = jax.block_until_ready(_l_spa_ref(org, enh))

    assert out.shape == ref.shape, (out.shape, ref.shape)
    assert jnp.allclose(out, ref, atol=1e-5, rtol=1e-5), float(jnp.max(jnp.abs(out - ref)))
    print("KERNEL_OK")
</pallas_src>

<mosaic_0001>
module attributes {stable_mosaic.version = 11 : i64} {
  func.func @_l_spa_kernel(%arg0: i32, %arg1: memref<8x32xf32, #tpu.memory_space<vmem>>, %arg2: memref<512x128xf32, #tpu.memory_space<vmem>>, %arg3: memref<2x3x32x512xf32, #tpu.memory_space<vmem>>, %arg4: memref<2x3x32x512xf32, #tpu.memory_space<vmem>>, %arg5: memref<2x1x8x128xf32, #tpu.memory_space<vmem>>) attributes {dimension_semantics = [#tpu.dimension_semantics<parallel>], iteration_bounds = array<i64: 2>, scalar_prefetch = 0 : i64, scratch_operands = 0 : i64, tpu.core_type = #tpu.core_type<tc>, window_params = [{pipeline_mode = #tpu.pipeline_mode<synchronous>, transform_indices = @transform_0, window_bounds = array<i64: 8, 32>}, {pipeline_mode = #tpu.pipeline_mode<synchronous>, transform_indices = @transform_1, window_bounds = array<i64: 512, 128>}, {transform_indices = @transform_2, window_bounds = array<i64: 2, 3, 32, 512>}, {transform_indices = @transform_3, window_bounds = array<i64: 2, 3, 32, 512>}, {transform_indices = @transform_4, window_bounds = array<i64: 2, 1, 8, 128>}]} {
    %c0 = arith.constant 0 : index
    %c0_0 = arith.constant 0 : index
    %0 = vector.load %arg1[%c0, %c0_0] : memref<8x32xf32, #tpu.memory_space<vmem>>, vector<8x32xf32>
    %c0_1 = arith.constant 0 : index
    %c0_2 = arith.constant 0 : index
    %1 = vector.load %arg2[%c0_1, %c0_2] : memref<512x128xf32, #tpu.memory_space<vmem>>, vector<512x128xf32>
    %2 = tpu.iota {dimensions = array<i32: 1>} : vector<8x128xi32>
    %3 = tpu.iota {dimensions = array<i32: 0>} : vector<8x128xi32>
    %c0_3 = arith.constant 0 : index
    %c0_4 = arith.constant 0 : index
    %c0_5 = arith.constant 0 : index
    %c0_6 = arith.constant 0 : index
    %4 = vector.load %arg3[%c0_3, %c0_4, %c0_5, %c0_6] : memref<2x3x32x512xf32, #tpu.memory_space<vmem>>, vector<1x1x32x512xf32>
    %5 = vector.shape_cast %4 : vector<1x1x32x512xf32> to vector<32x512xf32>
    %c0_7 = arith.constant 0 : index
    %c0_8 = arith.constant 0 : index
    %c0_9 = arith.constant 0 : index
    %c0_10 = arith.constant 0 : index
    %6 = vector.load %arg4[%c0_7, %c0_8, %c0_9, %c0_10] : memref<2x3x32x512xf32, #tpu.memory_space<vmem>>, vector<1x1x32x512xf32>
    %7 = vector.shape_cast %6 : vector<1x1x32x512xf32> to vector<32x512xf32>
    %8 = arith.subf %5, %7 : vector<32x512xf32>
    %c0_11 = arith.constant 0 : index
    %c1 = arith.constant 1 : index
    %c0_12 = arith.constant 0 : index
    %c0_13 = arith.constant 0 : index
    %9 = vector.load %arg3[%c0_11, %c1, %c0_12, %c0_13] : memref<2x3x32x512xf32, #tpu.memory_space<vmem>>, vector<1x1x32x512xf32>
    %10 = vector.shape_cast %9 : vector<1x1x32x512xf32> to vector<32x512xf32>
    %c0_14 = arith.constant 0 : index
    %c1_15 = arith.constant 1 : index
    %c0_16 = arith.constant 0 : index
    %c0_17 = arith.constant 0 : index
    %11 = vector.load %arg4[%c0_14, %c1_15, %c0_16, %c0_17] : memref<2x3x32x512xf32, #tpu.memory_space<vmem>>, vector<1x1x32x512xf32>
    %12 = vector.shape_cast %11 : vector<1x1x32x512xf32> to vector<32x512xf32>
    %13 = arith.subf %10, %12 : vector<32x512xf32>
    %14 = arith.addf %8, %13 : vector<32x512xf32>
    %c0_18 = arith.constant 0 : index
    %c2 = arith.constant 2 : index
    %c0_19 = arith.constant 0 : index
    %c0_20 = arith.constant 0 : index
    %15 = vector.load %arg3[%c0_18, %c2, %c0_19, %c0_20] : memref<2x3x32x512xf32, #tpu.memory_space<vmem>>, vector<1x1x32x512xf32>
    %16 = vector.shape_cast %15 : vector<1x1x32x512xf32> to vector<32x512xf32>
    %c0_21 = arith.constant 0 : index
    %c2_22 = arith.constant 2 : index
    %c0_23 = arith.constant 0 : index
    %c0_24 = arith.constant 0 : index
    %17 = vector.load %arg4[%c0_21, %c2_22, %c0_23, %c0_24] : memref<2x3x32x512xf32, #tpu.memory_space<vmem>>, vector<1x1x32x512xf32>
    %18 = vector.shape_cast %17 : vector<1x1x32x512xf32> to vector<32x512xf32>
    %19 = arith.subf %16, %18 : vector<32x512xf32>
    %20 = arith.addf %14, %19 : vector<32x512xf32>
    %cst = arith.constant dense<0.000000e+00> : vector<8x512xf32>
    %21 = tpu.matmul %0, %20, %cst {dimension_numbers = #tpu.dot_dimension_numbers<[1], [0], [0], [1], [0, 0, 1, 1], [], []>} : vector<8x32xf32>, vector<32x512xf32>, vector<8x512xf32> -> vector<8x512xf32>
    %cst_25 = arith.constant dense<0.000000e+00> : vector<8x128xf32>
    %22 = tpu.matmul %21, %1, %cst_25 {dimension_numbers = #tpu.dot_dimension_numbers<[1], [0], [0], [1], [0, 0, 1, 1], [], []>} : vector<8x512xf32>, vector<512x128xf32>, vector<8x128xf32> -> vector<8x128xf32>
    %cst_26 = arith.constant 0.020833334 : f32
    %23 = vector.broadcast %cst_26 : f32 to vector<8x128xf32>
    %24 = arith.mulf %22, %23 : vector<8x128xf32>
    %c0_i32 = arith.constant 0 : i32
    %25 = vector.broadcast %c0_i32 : i32 to vector<8x128xi32>
    %26 = arith.cmpi eq, %2, %25 : vector<8x128xi32>
    %c1_i32 = arith.constant 1 : i32
    %27 = tpu.dynamic_rotate %24 by %c1_i32 dim 1 : vector<8x128xf32>, i32 -> vector<8x128xf32>
    %cst_27 = arith.constant 0.000000e+00 : f32
    %28 = vector.broadcast %cst_27 : f32 to vector<8x128xf32>
    %29 = arith.select %26, %28, %27 : vector<8x128xi1>, vector<8x128xf32>
    %c127_i32 = arith.constant 127 : i32
    %30 = vector.broadcast %c127_i32 : i32 to vector<8x128xi32>
    %31 = arith.cmpi eq, %2, %30 : vector<8x128xi32>
    %c127_i32_28 = arith.constant 127 : i32
    %32 = tpu.dynamic_rotate %24 by %c127_i32_28 dim 1 : vector<8x128xf32>, i32 -> vector<8x128xf32>
    %cst_29 = arith.constant 0.000000e+00 : f32
    %33 = vector.broadcast %cst_29 : f32 to vector<8x128xf32>
    %34 = arith.select %31, %33, %32 : vector<8x128xi1>, vector<8x128xf32>
    %c0_i32_30 = arith.constant 0 : i32
    %35 = vector.broadcast %c0_i32_30 : i32 to vector<8x128xi32>
    %36 = arith.cmpi eq, %3, %35 : vector<8x128xi32>
    %c1_i32_31 = arith.constant 1 : i32
    %37 = tpu.dynamic_rotate %24 by %c1_i32_31 dim 0 : vector<8x128xf32>, i32 -> vector<8x128xf32>
    %cst_32 = arith.constant 0.000000e+00 : f32
    %38 = vector.broadcast %cst_32 : f32 to vector<8x128xf32>
    %39 = arith.select %36, %38, %37 : vector<8x128xi1>, vector<8x128xf32>
    %c7_i32 = arith.constant 7 : i32
    %40 = vector.broadcast %c7_i32 : i32 to vector<8x128xi32>
    %41 = arith.cmpi eq, %3, %40 : vector<8x128xi32>
    %c7_i32_33 = arith.constant 7 : i32
    %42 = tpu.dynamic_rotate %24 by %c7_i32_33 dim 0 : vector<8x128xf32>, i32 -> vector<8x128xf32>
    %cst_34 = arith.constant 0.000000e+00 : f32
    %43 = vector.broadcast %cst_34 : f32 to vector<8x128xf32>
    %44 = arith.select %41, %43, %42 : vector<8x128xi1>, vector<8x128xf32>
    %45 = arith.subf %24, %29 : vector<8x128xf32>
    %46 = arith.subf %24, %34 : vector<8x128xf32>
    %47 = arith.subf %24, %39 : vector<8x128xf32>
    %48 = arith.subf %24, %44 : vector<8x128xf32>
    %49 = arith.mulf %45, %45 : vector<8x128xf32>
    %50 = arith.mulf %46, %46 : vector<8x128xf32>
    %51 = arith.addf %49, %50 : vector<8x128xf32>
    %52 = arith.mulf %47, %47 : vector<8x128xf32>
    %53 = arith.addf %51, %52 : vector<8x128xf32>
    %54 = arith.mulf %48, %48 : vector<8x128xf32>
    %55 = arith.addf %53, %54 : vector<8x128xf32>
    %c0_35 = arith.constant 0 : index
    %c0_36 = arith.constant 0 : index
    %c0_37 = arith.constant 0 : index
    %c0_38 = arith.constant 0 : index
    %56 = vector.load %arg5[%c0_35, %c0_36, %c0_37, %c0_38] : memref<2x1x8x128xf32, #tpu.memory_space<vmem>>, vector<1x1x8x128xf32>
    %57 = vector.shape_cast %56 : vector<1x1x8x128xf32> to vector<8x128xf32>
    %58 = vector.shape_cast %55 : vector<8x128xf32> to vector<1x1x8x128xf32>
    tpu.vector_store %arg5[%c0_35, %c0_36, %c0_37, %c0_38], %58 {strides = array<i32>} : memref<2x1x8x128xf32, #tpu.memory_space<vmem>>, vector<1x1x8x128xf32>,
    %c1_39 = arith.constant 1 : index
    %c0_40 = arith.constant 0 : index
    %c0_41 = arith.constant 0 : index
    %c0_42 = arith.constant 0 : index
    %59 = vector.load %arg3[%c1_39, %c0_40, %c0_41, %c0_42] : memref<2x3x32x512xf32, #tpu.memory_space<vmem>>, vector<1x1x32x512xf32>
    %60 = vector.shape_cast %59 : vector<1x1x32x512xf32> to vector<32x512xf32>
    %c1_43 = arith.constant 1 : index
    %c0_44 = arith.constant 0 : index
    %c0_45 = arith.constant 0 : index
    %c0_46 = arith.constant 0 : index
    %61 = vector.load %arg4[%c1_43, %c0_44, %c0_45, %c0_46] : memref<2x3x32x512xf32, #tpu.memory_space<vmem>>, vector<1x1x32x512xf32>
    %62 = vector.shape_cast %61 : vector<1x1x32x512xf32> to vector<32x512xf32>
    %63 = arith.subf %60, %62 : vector<32x512xf32>
    %c1_47 = arith.constant 1 : index
    %c1_48 = arith.constant 1 : index
    %c0_49 = arith.constant 0 : index
    %c0_50 = arith.constant 0 : index
    %64 = vector.load %arg3[%c1_47, %c1_48, %c0_49, %c0_50] : memref<2x3x32x512xf32, #tpu.memory_space<vmem>>, vector<1x1x32x512xf32>
    %65 = vector.shape_cast %64 : vector<1x1x32x512xf32> to vector<32x512xf32>
    %c1_51 = arith.constant 1 : index
    %c1_52 = arith.constant 1 : index
    %c0_53 = arith.constant 0 : index
    %c0_54 = arith.constant 0 : index
    %66 = vector.load %arg4[%c1_51, %c1_52, %c0_53, %c0_54] : memref<2x3x32x512xf32, #tpu.memory_space<vmem>>, vector<1x1x32x512xf32>
    %67 = vector.shape_cast %66 : vector<1x1x32x512xf32> to vector<32x512xf32>
    %68 = arith.subf %65, %67 : vector<32x512xf32>
    %69 = arith.addf %63, %68 : vector<32x512xf32>
    %c1_55 = arith.constant 1 : index
    %c2_56 = arith.constant 2 : index
    %c0_57 = arith.constant 0 : index
    %c0_58 = arith.constant 0 : index
    %70 = vector.load %arg3[%c1_55, %c2_56, %c0_57, %c0_58] : memref<2x3x32x512xf32, #tpu.memory_space<vmem>>, vector<1x1x32x512xf32>
    %71 = vector.shape_cast %70 : vector<1x1x32x512xf32> to vector<32x512xf32>
    %c1_59 = arith.constant 1 : index
    %c2_60 = arith.constant 2 : index
    %c0_61 = arith.constant 0 : index
    %c0_62 = arith.constant 0 : index
    %72 = vector.load %arg4[%c1_59, %c2_60, %c0_61, %c0_62] : memref<2x3x32x512xf32, #tpu.memory_space<vmem>>, vector<1x1x32x512xf32>
    %73 = vector.shape_cast %72 : vector<1x1x32x512xf32> to vector<32x512xf32>
    %74 = arith.subf %71, %73 : vector<32x512xf32>
    %75 = arith.addf %69, %74 : vector<32x512xf32>
    %cst_63 = arith.constant dense<0.000000e+00> : vector<8x512xf32>
    %76 = tpu.matmul %0, %75, %cst_63 {dimension_numbers = #tpu.dot_dimension_numbers<[1], [0], [0], [1], [0, 0, 1, 1], [], []>} : vector<8x32xf32>, vector<32x512xf32>, vector<8x512xf32> -> vector<8x512xf32>
    %cst_64 = arith.constant dense<0.000000e+00> : vector<8x128xf32>
    %77 = tpu.matmul %76, %1, %cst_64 {dimension_numbers = #tpu.dot_dimension_numbers<[1], [0], [0], [1], [0, 0, 1, 1], [], []>} : vector<8x512xf32>, vector<512x128xf32>, vector<8x128xf32> -> vector<8x128xf32>
    %cst_65 = arith.constant 0.020833334 : f32
    %78 = vector.broadcast %cst_65 : f32 to vector<8x128xf32>
    %79 = arith.mulf %77, %78 : vector<8x128xf32>
    %c0_i32_66 = arith.constant 0 : i32
    %80 = vector.broadcast %c0_i32_66 : i32 to vector<8x128xi32>
    %81 = arith.cmpi eq, %2, %80 : vector<8x128xi32>
    %c1_i32_67 = arith.constant 1 : i32
    %82 = tpu.dynamic_rotate %79 by %c1_i32_67 dim 1 : vector<8x128xf32>, i32 -> vector<8x128xf32>
    %cst_68 = arith.constant 0.000000e+00 : f32
    %83 = vector.broadcast %cst_68 : f32 to vector<8x128xf32>
    %84 = arith.select %81, %83, %82 : vector<8x128xi1>, vector<8x128xf32>
    %c127_i32_69 = arith.constant 127 : i32
    %85 = vector.broadcast %c127_i32_69 : i32 to vector<8x128xi32>
    %86 = arith.cmpi eq, %2, %85 : vector<8x128xi32>
    %c127_i32_70 = arith.constant 127 : i32
    %87 = tpu.dynamic_rotate %79 by %c127_i32_70 dim 1 : vector<8x128xf32>, i32 -> vector<8x128xf32>
    %cst_71 = arith.constant 0.000000e+00 : f32
    %88 = vector.broadcast %cst_71 : f32 to vector<8x128xf32>
    %89 = arith.select %86, %88, %87 : vector<8x128xi1>, vector<8x128xf32>
    %c0_i32_72 = arith.constant 0 : i32
    %90 = vector.broadcast %c0_i32_72 : i32 to vector<8x128xi32>
    %91 = arith.cmpi eq, %3, %90 : vector<8x128xi32>
    %c1_i32_73 = arith.constant 1 : i32
    %92 = tpu.dynamic_rotate %79 by %c1_i32_73 dim 0 : vector<8x128xf32>, i32 -> vector<8x128xf32>
    %cst_74 = arith.constant 0.000000e+00 : f32
    %93 = vector.broadcast %cst_74 : f32 to vector<8x128xf32>
    %94 = arith.select %91, %93, %92 : vector<8x128xi1>, vector<8x128xf32>
    %c7_i32_75 = arith.constant 7 : i32
    %95 = vector.broadcast %c7_i32_75 : i32 to vector<8x128xi32>
    %96 = arith.cmpi eq, %3, %95 : vector<8x128xi32>
    %c7_i32_76 = arith.constant 7 : i32
    %97 = tpu.dynamic_rotate %79 by %c7_i32_76 dim 0 : vector<8x128xf32>, i32 -> vector<8x128xf32>
    %cst_77 = arith.constant 0.000000e+00 : f32
    %98 = vector.broadcast %cst_77 : f32 to vector<8x128xf32>
    %99 = arith.select %96, %98, %97 : vector<8x128xi1>, vector<8x128xf32>
    %100 = arith.subf %79, %84 : vector<8x128xf32>
    %101 = arith.subf %79, %89 : vector<8x128xf32>
    %102 = arith.subf %79, %94 : vector<8x128xf32>
    %103 = arith.subf %79, %99 : vector<8x128xf32>
    %104 = arith.mulf %100, %100 : vector<8x128xf32>
    %105 = arith.mulf %101, %101 : vector<8x128xf32>
    %106 = arith.addf %104, %105 : vector<8x128xf32>
    %107 = arith.mulf %102, %102 : vector<8x128xf32>
    %108 = arith.addf %106, %107 : vector<8x128xf32>
    %109 = arith.mulf %103, %103 : vector<8x128xf32>
    %110 = arith.addf %108, %109 : vector<8x128xf32>
    %c1_78 = arith.constant 1 : index
    %c0_79 = arith.constant 0 : index
    %c0_80 = arith.constant 0 : index
    %c0_81 = arith.constant 0 : index
    %111 = vector.load %arg5[%c1_78, %c0_79, %c0_80, %c0_81] : memref<2x1x8x128xf32, #tpu.memory_space<vmem>>, vector<1x1x8x128xf32>
    %112 = vector.shape_cast %111 : vector<1x1x8x128xf32> to vector<8x128xf32>
    %113 = vector.shape_cast %110 : vector<8x128xf32> to vector<1x1x8x128xf32>
    tpu.vector_store %arg5[%c1_78, %c0_79, %c0_80, %c0_81], %113 {strides = array<i32>} : memref<2x1x8x128xf32, #tpu.memory_space<vmem>>, vector<1x1x8x128xf32>,
    return
  }
  func.func @transform_0(%arg0: i32) -> (i32, i32) {
    %c0_i32 = arith.constant 0 : i32
    %c0_i32_0 = arith.constant 0 : i32
    %c0_i32_1 = arith.constant 0 : i32
    return %c0_i32, %c0_i32_0 : i32, i32
  }
  func.func @transform_1(%arg0: i32) -> (i32, i32) {
    %c0_i32 = arith.constant 0 : i32
    %c0_i32_0 = arith.constant 0 : i32
    %c0_i32_1 = arith.constant 0 : i32
    return %c0_i32, %c0_i32_0 : i32, i32
  }
  func.func @transform_2(%arg0: i32) -> (i32, i32, i32, i32) {
    %c0_i32 = arith.constant 0 : i32
    %c0_i32_0 = arith.constant 0 : i32
    %c0_i32_1 = arith.constant 0 : i32
    %c0_i32_2 = arith.constant 0 : i32
    return %arg0, %c0_i32, %c0_i32_0, %c0_i32_1 : i32, i32, i32, i32
  }
  func.func @transform_3(%arg0: i32) -> (i32, i32, i32, i32) {
    %c0_i32 = arith.constant 0 : i32
    %c0_i32_0 = arith.constant 0 : i32
    %c0_i32_1 = arith.constant 0 : i32
    %c0_i32_2 = arith.constant 0 : i32
    return %arg0, %c0_i32, %c0_i32_0, %c0_i32_1 : i32, i32, i32, i32
  }
  func.func @transform_4(%arg0: i32) -> (i32, i32, i32, i32) {
    %c0_i32 = arith.constant 0 : i32
    %c0_i32_0 = arith.constant 0 : i32
    %c0_i32_1 = arith.constant 0 : i32
    %c0_i32_2 = arith.constant 0 : i32
    return %arg0, %c0_i32, %c0_i32_0, %c0_i32_1 : i32, i32, i32, i32
  }
}

</mosaic_0001>

<llo_original>
// kernel: tpu_custom_call.1
$region0: #{tpu_custom_call.1}
  #allocation0 [shape = 'u32[]', space=smem, size = 0x4, offset = 0x4, fixed_abs, tag = 'smem constant byte address 0x4 - core index']
  #allocation1 [shape = 'u32[144,128]{1,0:T(1,128)}', space=vmem, size = 0x12000, scoped, tag = 'internal scratch']
  %s0 = inlined_call_operand.hbm [shape: f32[8,32], index: 0, kind: input, shape index: {}]
  %s1 = inlined_call_operand.hbm [shape: f32[512,128], index: 1, kind: input, shape index: {}]
  %s2 = inlined_call_operand.hbm [shape: f32[4,3,32,512], index: 2, kind: input, shape index: {}]
  %s3 = inlined_call_operand.hbm [shape: f32[4,3,32,512], index: 3, kind: input, shape index: {}]
  %s4 = inlined_call_operand.hbm [shape: f32[4,1,8,128], index: 4, kind: output, shape index: {}]
  %s5 = sld [smem:[#allocation0]]
  $region65: #{tpu_custom_call.1} parent=0
    _
  %s7 = ssub.s32 1, %s5
  %s8 = scalar_select 0, %s7, %s5
  $region1: #{tpu_custom_call.1} parent=0
    #allocation2 [shape = 'u8[4096]{0}', space=vmem, size = 0x1000, scoped, tag = 'input window, operand 0, single buffered']
    #allocation3 [shape = 's32[2]{0}', space=sflag, size = 0x8, scoped, tag = 'scoped memory for tpu_custom_call.1']
    #allocation4 [shape = 's32[2]{0}', space=sflag, size = 0x8, scoped, tag = 'scoped memory for tpu_custom_call.1']
    #allocation5 [shape = 'u8[262144]{0}', space=vmem, size = 0x40000, scoped, tag = 'input window, operand 1, single buffered']
    #allocation6 [shape = 's32[1]{0}', space=sflag, size = 0x4, scoped, tag = 'scoped memory for tpu_custom_call.1']
    #allocation7 [shape = 'u8[786432]{0}', space=vmem, size = 0xc0000, scoped, tag = 'input window, operand 2']
    #allocation8 [shape = 'u8[786432]{0}', space=vmem, size = 0xc0000, scoped, tag = 'input window, operand 3']
    #allocation9 [shape = 'u8[16384]{0}', space=vmem, size = 0x4000, scoped, tag = 'output window, operand 0']
    %9 = vsyncpa [#allocation3], 0
    %10 = vsyncpa [#allocation6], 0
    %11 = vsyncpa [#allocation4], 0
    %s12 = scalar_lea.sflag [#allocation4], 1
    %13 = vsyncpa %s12, 0
    loop: start=0, step=1, limit=4
    $region2: #{tpu_custom_call.1} parent=1 // loop_pre_header
      _
    $region3: #{tpu_custom_call.1} parent=1 // loop_header
      %s15 = sphi 0, %s19
      %p16 = scmp.ge.s32.totalorder %s15, 4
      %s23 = sphi 0, %s23
      %s25 = sphi 0, %s23
      %s26 = sphi 0, %s25
      %s40 = sphi 0, %s26
      %s44 = sphi 0, %s44
      %s46 = sphi 0, %s44
      %s47 = sphi 0, %s46
      %s61 = sphi 0, %s47
      %s67 = sphi 0, %s69
      %s70 = sphi 0, %s67
      %s71 = sphi 0, %s70
      %s87 = sphi 0, %s71
      %s93 = sphi 0, %s95
      %s96 = sphi 0, %s93
      %s97 = sphi 0, %s96
      %s113 = sphi 0, %s97
      %s119 = sphi 0, %s121
      %s122 = sphi 0, %s119
      %s123 = sphi 0, %s122
      %s139 = sphi 0, %s123
    $region4: #{tpu_custom_call.1} parent=1 // loop_header_branch
      %18 = sbr.rel (%p16) target = $region8
    $region5: #{tpu_custom_call.1} parent=1 // loop_body
      %s20 = ssub.s32 %s15, 1
      %s21 = ssub.s32 %s15, 2
      %s22 = sadd.s32 %s15, 1
      %s24 = sadd.s32 %s23, 1
      %p27 = scmp.eq.s32.totalorder %s15, 1
      %p28 = scmp.ne.s32.totalorder %s23, %s25
      %p29 = scmp.eq.s32.totalorder %s15, 0
      %p30 = por %p28, %p29
      %p31 = scmp.ne.s32.totalorder %s23, %s25
      %p32 = scmp.eq.s32.totalorder %s20, 1
      %p33 = por %p31, %p32
      %p34 = scmp.ne.s32.totalorder %s25, %s26
      %p35 = scmp.eq.s32.totalorder %s20, 0
      %p36 = por %p34, %p35
      %p37 = scmp.ne.s32.totalorder %s25, %s26
      %p38 = scmp.eq.s32.totalorder %s21, 1
      %p39 = por %p37, %p38
      %p41 = scmp.ne.s32.totalorder %s26, %s40
      %p42 = scmp.eq.s32.totalorder %s21, 0
      %p43 = por %p41, %p42
      %s45 = sadd.s32 %s44, 1
      %p48 = scmp.eq.s32.totalorder %s15, 1
      %p49 = scmp.ne.s32.totalorder %s44, %s46
      %p50 = scmp.eq.s32.totalorder %s15, 0
      %p51 = por %p49, %p50
      %p52 = scmp.ne.s32.totalorder %s44, %s46
      %p53 = scmp.eq.s32.totalorder %s20, 1
      %p54 = por %p52, %p53
      %p55 = scmp.ne.s32.totalorder %s46, %s47
      %p56 = scmp.eq.s32.totalorder %s20, 0
      %p57 = por %p55, %p56
      %p58 = scmp.ne.s32.totalorder %s46, %s47
      %p59 = scmp.eq.s32.totalorder %s21, 1
      %p60 = por %p58, %p59
      %p62 = scmp.ne.s32.totalorder %s47, %s61
      %p63 = scmp.eq.s32.totalorder %s21, 0
      %p64 = por %p62, %p63
      %s65 = ssub.s32 %s15, %s22
      %p66 = scmp.eq.s32.totalorder %s65, 0
      %s68 = sadd.s32 %s67, 1
      %s69 = scalar_select %p66, %s67, %s68
      %p72 = pneg %p66
      %p73 = scmp.eq.s32.totalorder %s15, 1
      %p74 = por %p72, %p73
      %p75 = scmp.ne.s32.totalorder %s67, %s70
      %p76 = scmp.eq.s32.totalorder %s15, 0
      %p77 = por %p75, %p76
      %p78 = scmp.ne.s32.totalorder %s67, %s70
      %p79 = scmp.eq.s32.totalorder %s20, 1
      %p80 = por %p78, %p79
      %p81 = scmp.ne.s32.totalorder %s70, %s71
      %p82 = scmp.eq.s32.totalorder %s20, 0
      %p83 = por %p81, %p82
      %p84 = scmp.ne.s32.totalorder %s70, %s71
      %p85 = scmp.eq.s32.totalorder %s21, 1
      %p86 = por %p84, %p85
      %p88 = scmp.ne.s32.totalorder %s71, %s87
      %p89 = scmp.eq.s32.totalorder %s21, 0
      %p90 = por %p88, %p89
      %s91 = ssub.s32 %s15, %s22
      %p92 = scmp.eq.s32.totalorder %s91, 0
      %s94 = sadd.s32 %s93, 1
      %s95 = scalar_select %p92, %s93, %s94
      %p98 = pneg %p92
      %p99 = scmp.eq.s32.totalorder %s15, 1
      %p100 = por %p98, %p99
      %p101 = scmp.ne.s32.totalorder %s93, %s96
      %p102 = scmp.eq.s32.totalorder %s15, 0
      %p103 = por %p101, %p102
      %p104 = scmp.ne.s32.totalorder %s93, %s96
      %p105 = scmp.eq.s32.totalorder %s20, 1
      %p106 = por %p104, %p105
      %p107 = scmp.ne.s32.totalorder %s96, %s97
      %p108 = scmp.eq.s32.totalorder %s20, 0
      %p109 = por %p107, %p108
      %p110 = scmp.ne.s32.totalorder %s96, %s97
      %p111 = scmp.eq.s32.totalorder %s21, 1
      %p112 = por %p110, %p111
      %p114 = scmp.ne.s32.totalorder %s97, %s113
      %p115 = scmp.eq.s32.totalorder %s21, 0
      %p116 = por %p114, %p115
      %s117 = ssub.s32 %s15, %s22
      %p118 = scmp.eq.s32.totalorder %s117, 0
      %s120 = sadd.s32 %s119, 1
      %s121 = scalar_select %p118, %s119, %s120
      %p124 = pneg %p118
      %p125 = scmp.eq.s32.totalorder %s15, 1
      %p126 = por %p124, %p125
      %p127 = scmp.ne.s32.totalorder %s119, %s122
      %p128 = scmp.eq.s32.totalorder %s15, 0
      %p129 = por %p127, %p128
      %p130 = scmp.ne.s32.totalorder %s119, %s122
      %p131 = scmp.eq.s32.totalorder %s20, 1
      %p132 = por %p130, %p131
      %p133 = scmp.ne.s32.totalorder %s122, %s123
      %p134 = scmp.eq.s32.totalorder %s20, 0
      %p135 = por %p133, %p134
      %p136 = scmp.ne.s32.totalorder %s122, %s123
      %p137 = scmp.eq.s32.totalorder %s21, 1
      %p138 = por %p136, %p137
      %p140 = scmp.ne.s32.totalorder %s123, %s139
      %p141 = scmp.eq.s32.totalorder %s21, 0
      %p142 = por %p140, %p141
      %p143 = scmp.le.s32.totalorder 1, %s15
      %p144 = scmp.lt.s32.totalorder %s15, 3
      %p145 = pnand %p143, %p144
      %p146 = pneg %p145
      // Predicated region
      $region9: #{tpu_custom_call.1} parent=5 // pred_check
        _
      $region10: #{tpu_custom_call.1} parent=5 // pred_check_branch
        %148 = sbr.rel (%p145) target = $region12
      $region11: #{tpu_custom_call.1} parent=5 // pred_region
        %s149 = ssub.s32 %s15, 1
        // Predicated region
        $region13: #{tpu_custom_call.1} parent=11 // pred_check
          %p150 = pneg %p36
        $region14: #{tpu_custom_call.1} parent=11 // pred_check_branch
          %152 = sbr.rel (%p150) target = $region16
        $region15: #{tpu_custom_call.1} parent=11 // pred_region
          %s154 = ssub.s32 128, 128
          %155 = vsyncadd [#allocation3], %s154
          %s157 = sshll.u32 [#allocation2], 4
          %s158 = int_to_ptr.vmem [resolvable:$true] %s157
          %160 = dma.hbm_to_vmem [thread:$0]  %s0, 128, %s158, [#allocation3]
        $region16: #{tpu_custom_call.1} parent=11 // pred_fallthru
          _
        // Predicated region
        $region17: #{tpu_custom_call.1} parent=11 // pred_check
          %p161 = pneg %p57
        $region18: #{tpu_custom_call.1} parent=11 // pred_check_branch
          %163 = sbr.rel (%p161) target = $region20
        $region19: #{tpu_custom_call.1} parent=11 // pred_region
          %s165 = ssub.s32 8192, 8192
          %166 = vsyncadd [#allocation6], %s165
          %s167 = sshll.u32 [#allocation5], 4
          %s168 = int_to_ptr.vmem [resolvable:$true] %s167
          %173 = dma.hbm_to_vmem [thread:$0]  %s1, 8192, %s168, [#allocation6], 128, 128, 8
        $region20: #{tpu_custom_call.1} parent=11 // pred_fallthru
          _
      $region12: #{tpu_custom_call.1} parent=5 // pred_fallthru
        _
      %p174 = scmp.lt.s32.totalorder %s15, 2
      // Predicated region
      $region21: #{tpu_custom_call.1} parent=5 // pred_check
        %p175 = pneg %p174
      $region22: #{tpu_custom_call.1} parent=5 // pred_check_branch
        %177 = sbr.rel (%p175) target = $region24
      $region23: #{tpu_custom_call.1} parent=5 // pred_region
        // Predicated region
        $region25: #{tpu_custom_call.1} parent=23 // pred_check
          %p178 = pneg %p77
        $region26: #{tpu_custom_call.1} parent=23 // pred_check_branch
          %180 = sbr.rel (%p178) target = $region28
        $region27: #{tpu_custom_call.1} parent=23 // pred_region
          %s181 = sand.u32 %s15, 1
          %s182 = scalar_lea.sflag [#allocation3], %s181
          %s183 = sand.u32 %s67, 1
          %s184 = smul.addr %s183, 768
          %s185 = scalar_lea.vmem [#allocation7], %s184
          %s186 = smul.u32 2, %s15
          %s188 = ssub.s32 12288, 12288
          %189 = vsyncadd %s182, %s188
          %s190 = smul.addr %s186, 48
          %s191 = smul.addr %s190, 128
          %s192 = scalar_lea.hbm %s2, %s191
          %s193 = sshll.u32 %s185, 4
          %s194 = int_to_ptr.vmem [resolvable:$true] %s193
          %199 = dma.hbm_to_vmem [thread:$0]  %s192, 12288, %s194, %s182, 512, 512, 32
        $region28: #{tpu_custom_call.1} parent=23 // pred_fallthru
          _
        // Predicated region
        $region29: #{tpu_custom_call.1} parent=23 // pred_check
          %p200 = pneg %p103
        $region30: #{tpu_custom_call.1} parent=23 // pred_check_branch
          %202 = sbr.rel (%p200) target = $region32
        $region31: #{tpu_custom_call.1} parent=23 // pred_region
          %s203 = sand.u32 %s15, 1
          %s204 = scalar_lea.sflag [#allocation3], %s203
          %s205 = sand.u32 %s93, 1
          %s206 = smul.addr %s205, 768
          %s207 = scalar_lea.vmem [#allocation8], %s206
          %s208 = smul.u32 2, %s15
          %s210 = ssub.s32 12288, 12288
          %211 = vsyncadd %s204, %s210
          %s212 = smul.addr %s208, 48
          %s213 = smul.addr %s212, 128
          %s214 = scalar_lea.hbm %s3, %s213
          %s215 = sshll.u32 %s207, 4
          %s216 = int_to_ptr.vmem [resolvable:$true] %s215
          %221 = dma.hbm_to_vmem [thread:$0]  %s214, 12288, %s216, %s204, 512, 512, 32
        $region32: #{tpu_custom_call.1} parent=23 // pred_fallthru
          _
      $region24: #{tpu_custom_call.1} parent=5 // pred_fallthru
        _
      %p222 = scmp.le.s32.totalorder 1, %s15
      %p223 = scmp.lt.s32.totalorder %s15, 3
      %p224 = pnand %p222, %p223
      %p225 = pneg %p224
      // Predicated region
      $region33: #{tpu_custom_call.1} parent=5 // pred_check
        _
      $region34: #{tpu_custom_call.1} parent=5 // pred_check_branch
        %227 = sbr.rel (%p224) target = $region36
      $region35: #{tpu_custom_call.1} parent=5 // pred_region
        %s228 = ssub.s32 %s15, 1
        // Predicated region
        $region37: #{tpu_custom_call.1} parent=35 // pred_check
          %p229 = pneg %p36
        $region38: #{tpu_custom_call.1} parent=35 // pred_check_branch
          %231 = sbr.rel (%p229) target = $region40
        $region39: #{tpu_custom_call.1} parent=35 // pred_region
          %232 = dma.done [#allocation3], 128
        $region40: #{tpu_custom_call.1} parent=35 // pred_fallthru
          _
        // Predicated region
        $region41: #{tpu_custom_call.1} parent=35 // pred_check
          %p233 = pneg %p57
        $region42: #{tpu_custom_call.1} parent=35 // pred_check_branch
          %235 = sbr.rel (%p233) target = $region44
        $region43: #{tpu_custom_call.1} parent=35 // pred_region
          %236 = dma.done [#allocation6], 8192
        $region44: #{tpu_custom_call.1} parent=35 // pred_fallthru
          _
        %s237 = sand.u32 %s20, 1
        %s238 = scalar_lea.sflag [#allocation3], %s237
        %s239 = sand.u32 %s70, 1
        %s240 = smul.addr %s239, 768
        %s241 = scalar_lea.vmem [#allocation7], %s240
        // Predicated region
        $region45: #{tpu_custom_call.1} parent=35 // pred_check
          %p242 = pneg %p83
        $region46: #{tpu_custom_call.1} parent=35 // pred_check_branch
          %244 = sbr.rel (%p242) target = $region48
        $region47: #{tpu_custom_call.1} parent=35 // pred_region
          %245 = dma.done %s238, 12288
        $region48: #{tpu_custom_call.1} parent=35 // pred_fallthru
          _
        %s246 = sand.u32 %s20, 1
        %s247 = scalar_lea.sflag [#allocation3], %s246
        %s248 = sand.u32 %s96, 1
        %s249 = smul.addr %s248, 768
        %s250 = scalar_lea.vmem [#allocation8], %s249
        // Predicated region
        $region49: #{tpu_custom_call.1} parent=35 // pred_check
          %p251 = pneg %p109
        $region50: #{tpu_custom_call.1} parent=35 // pred_check_branch
          %253 = sbr.rel (%p251) target = $region52
        $region51: #{tpu_custom_call.1} parent=35 // pred_region
          %254 = dma.done %s247, 12288
        $region52: #{tpu_custom_call.1} parent=35 // pred_fallthru
          _
        %p255 = pneg %p36
        %p256 = pneg %p33
        %p257 = pneg %p57
        %p258 = pneg %p54
        %s259 = sand.u32 %s20, 1
        %s260 = scalar_lea.sflag [#allocation3], %s259
        %s261 = sand.u32 %s70, 1
        %s262 = smul.addr %s261, 768
        %s263 = scalar_lea.vmem [#allocation7], %s262
        %p264 = pneg %p83
        %p265 = pneg %p80
        %s266 = sand.u32 %s20, 1
        %s267 = scalar_lea.sflag [#allocation3], %s266
        %s268 = sand.u32 %s96, 1
        %s269 = smul.addr %s268, 768
        %s270 = scalar_lea.vmem [#allocation8], %s269
        %p271 = pneg %p109
        %p272 = pneg %p106
        %p273 = pneg %p135
        %p274 = pneg %p132
        %s275 = sand.u32 %s122, 1
        %s276 = scalar_lea.sflag [#allocation4], %s275
        %s277 = sand.u32 %s122, 1
        %s278 = smul.addr %s277, 16
        %s279 = scalar_lea.vmem [#allocation9], %s278
        %s280 = smul.u32 2, %s20
        %s281 = smul.u32 2, %s20
        %s282 = smul.u32 2, %s20
        %v283 = vld [vmem:[#allocation2] sm:$0xff]
        %v284 = vld [vmem:[#allocation5] sm:$0xff]
        %v285 = vld [vmem:[#allocation5 + $0x8] sm:$0xff]
        %v286 = vld [vmem:[#allocation5 + $0x10] sm:$0xff]
        %v287 = vld [vmem:[#allocation5 + $0x18] sm:$0xff]
        %v288 = vld [vmem:[#allocation5 + $0x20] sm:$0xff]
        %v289 = vld [vmem:[#allocation5 + $0x28] sm:$0xff]
        %v290 = vld [vmem:[#allocation5 + $0x30] sm:$0xff]
        %v291 = vld [vmem:[#allocation5 + $0x38] sm:$0xff]
        %v292 = vld [vmem:[#allocation5 + $0x40] sm:$0xff]
        %v293 = vld [vmem:[#allocation5 + $0x48] sm:$0xff]
        %v294 = vld [vmem:[#allocation5 + $0x50] sm:$0xff]
        %v295 = vld [vmem:[#allocation5 + $0x58] sm:$0xff]
        %v296 = vld [vmem:[#allocation5 + $0x60] sm:$0xff]
        %v297 = vld [vmem:[#allocation5 + $0x68] sm:$0xff]
        %v298 = vld [vmem:[#allocation5 + $0x70] sm:$0xff]
        %v299 = vld [vmem:[#allocation5 + $0x78] sm:$0xff]
        %v300 = vld [vmem:[#allocation5 + $0x80] sm:$0xff]
        %v301 = vld [vmem:[#allocation5 + $0x88] sm:$0xff]
        %v302 = vld [vmem:[#allocation5 + $0x90] sm:$0xff]
        %v303 = vld [vmem:[#allocation5 + $0x98] sm:$0xff]
        %v304 = vld [vmem:[#allocation5 + $0xa0] sm:$0xff]
        %v305 = vld [vmem:[#allocation5 + $0xa8] sm:$0xff]
        %v306 = vld [vmem:[#allocation5 + $0xb0] sm:$0xff]
        %v307 = vld [vmem:[#allocation5 + $0xb8] sm:$0xff]
        %v308 = vld [vmem:[#allocation5 + $0xc0] sm:$0xff]
        %v309 = vld [vmem:[#allocation5 + $0xc8] sm:$0xff]
        %v310 = vld [vmem:[#allocation5 + $0xd0] sm:$0xff]
        %v311 = vld [vmem:[#allocation5 + $0xd8] sm:$0xff]
        %v312 = vld [vmem:[#allocation5 + $0xe0] sm:$0xff]
        %v313 = vld [vmem:[#allocation5 + $0xe8] sm:$0xff]
        %v314 = vld [vmem:[#allocation5 + $0xf0] sm:$0xff]
        %v315 = vld [vmem:[#allocation5 + $0xf8] sm:$0xff]
        %v316 = vld [vmem:[#allocation5 + $0x100] sm:$0xff]
        %v317 = vld [vmem:[#allocation5 + $0x108] sm:$0xff]
        %v318 = vld [vmem:[#allocation5 + $0x110] sm:$0xff]
        %v319 = vld [vmem:[#allocation5 + $0x118] sm:$0xff]
        %v320 = vld [vmem:[#allocation5 + $0x120] sm:$0xff]
        %v321 = vld [vmem:[#allocation5 + $0x128] sm:$0xff]
        %v322 = vld [vmem:[#allocation5 + $0x130] sm:$0xff]
        %v323 = vld [vmem:[#allocation5 + $0x138] sm:$0xff]
        %v324 = vld [vmem:[#allocation5 + $0x140] sm:$0xff]
        %v325 = vld [vmem:[#allocation5 + $0x148] sm:$0xff]
        %v326 = vld [vmem:[#allocation5 + $0x150] sm:$0xff]
        %v327 = vld [vmem:[#allocation5 + $0x158] sm:$0xff]
        %v328 = vld [vmem:[#allocation5 + $0x160] sm:$0xff]
        %v329 = vld [vmem:[#allocation5 + $0x168] sm:$0xff]
        %v330 = vld [vmem:[#allocation5 + $0x170] sm:$0xff]
        %v331 = vld [vmem:[#allocation5 + $0x178] sm:$0xff]
        %v332 = vld [vmem:[#allocation5 + $0x180] sm:$0xff]
        %v333 = vld [vmem:[#allocation5 + $0x188] sm:$0xff]
        %v334 = vld [vmem:[#allocation5 + $0x190] sm:$0xff]
        %v335 = vld [vmem:[#allocation5 + $0x198] sm:$0xff]
        %v336 = vld [vmem:[#allocation5 + $0x1a0] sm:$0xff]
        %v337 = vld [vmem:[#allocation5 + $0x1a8] sm:$0xff]
        %v338 = vld [vmem:[#allocation5 + $0x1b0] sm:$0xff]
        %v339 = vld [vmem:[#allocation5 + $0x1b8] sm:$0xff]
        %v340 = vld [vmem:[#allocation5 + $0x1c0] sm:$0xff]
        %v341 = vld [vmem:[#allocation5 + $0x1c8] sm:$0xff]
        %v342 = vld [vmem:[#allocation5 + $0x1d0] sm:$0xff]
        %v343 = vld [vmem:[#allocation5 + $0x1d8] sm:$0xff]
        %v344 = vld [vmem:[#allocation5 + $0x1e0] sm:$0xff]
        %v345 = vld [vmem:[#allocation5 + $0x1e8] sm:$0xff]
        %v346 = vld [vmem:[#allocation5 + $0x1f0] sm:$0xff]
        %v347 = vld [vmem:[#allocation5 + $0x1f8] sm:$0xff]
        %v348 = vlaneseq
        %v349 = vand.u32 %v348, 127
        %v350 = vlaneseq
        %v351 = vshrl.u32 %v350, 7
        %v352 = vld [vmem:[%s241] sm:$0xff]
        %v353 = vld [vmem:[%s241 + $0x8] sm:$0xff]
        %v354 = vld [vmem:[%s241 + $0x10] sm:$0xff]
        %v355 = vld [vmem:[%s241 + $0x18] sm:$0xff]
        %v356 = vld [vmem:[%s241 + $0x20] sm:$0xff]
        %v357 = vld [vmem:[%s241 + $0x28] sm:$0xff]
        %v358 = vld [vmem:[%s241 + $0x30] sm:$0xff]
        %v359 = vld [vmem:[%s241 + $0x38] sm:$0xff]
        %v360 = vld [vmem:[%s241 + $0x40] sm:$0xff]
        %v361 = vld [vmem:[%s241 + $0x48] sm:$0xff]
        %v362 = vld [vmem:[%s241 + $0x50] sm:$0xff]
        %v363 = vld [vmem:[%s241 + $0x58] sm:$0xff]
        %v364 = vld [vmem:[%s241 + $0x60] sm:$0xff]
        %v365 = vld [vmem:[%s241 + $0x68] sm:$0xff]
        %v366 = vld [vmem:[%s241 + $0x70] sm:$0xff]
        %v367 = vld [vmem:[%s241 + $0x78] sm:$0xff]
        %v368 = vld [vmem:[%s250] sm:$0xff]
        %v369 = vld [vmem:[%s250 + $0x8] sm:$0xff]
        %v370 = vld [vmem:[%s250 + $0x10] sm:$0xff]
        %v371 = vld [vmem:[%s250 + $0x18] sm:$0xff]
        %v372 = vld [vmem:[%s250 + $0x20] sm:$0xff]
        %v373 = vld [vmem:[%s250 + $0x28] sm:$0xff]
        %v374 = vld [vmem:[%s250 + $0x30] sm:$0xff]
        %v375 = vld [vmem:[%s250 + $0x38] sm:$0xff]
        %v376 = vld [vmem:[%s250 + $0x40] sm:$0xff]
        %v377 = vld [vmem:[%s250 + $0x48] sm:$0xff]
        %v378 = vld [vmem:[%s250 + $0x50] sm:$0xff]
        %v379 = vld [vmem:[%s250 + $0x58] sm:$0xff]
        %v380 = vld [vmem:[%s250 + $0x60] sm:$0xff]
        %v381 = vld [vmem:[%s250 + $0x68] sm:$0xff]
        %v382 = vld [vmem:[%s250 + $0x70] sm:$0xff]
        %v383 = vld [vmem:[%s250 + $0x78] sm:$0xff]
        %v384 = vsub.f32 %v352, %v368
        %v385 = vsub.f32 %v353, %v369
        %v386 = vsub.f32 %v354, %v370
        %v387 = vsub.f32 %v355, %v371
        %v388 = vsub.f32 %v356, %v372
        %v389 = vsub.f32 %v357, %v373
        %v390 = vsub.f32 %v358, %v374
        %v391 = vsub.f32 %v359, %v375
        %v392 = vsub.f32 %v360, %v376
        %v393 = vsub.f32 %v361, %v377
        %v394 = vsub.f32 %v362, %v378
        %v395 = vsub.f32 %v363, %v379
        %v396 = vsub.f32 %v364, %v380
        %v397 = vsub.f32 %v365, %v381
        %v398 = vsub.f32 %v366, %v382
        %v399 = vsub.f32 %v367, %v383
        %s400 = scalar_lea.vmem %s241, 128 [#allocation7]
        %v401 = vld [vmem:[%s400] sm:$0xff]
        %v402 = vld [vmem:[%s400 + $0x8] sm:$0xff]
        %v403 = vld [vmem:[%s400 + $0x10] sm:$0xff]
        %v404 = vld [vmem:[%s400 + $0x18] sm:$0xff]
        %v405 = vld [vmem:[%s400 + $0x20] sm:$0xff]
        %v406 = vld [vmem:[%s400 + $0x28] sm:$0xff]
        %v407 = vld [vmem:[%s400 + $0x30] sm:$0xff]
        %v408 = vld [vmem:[%s400 + $0x38] sm:$0xff]
        %v409 = vld [vmem:[%s400 + $0x40] sm:$0xff]
        %v410 = vld [vmem:[%s400 + $0x48] sm:$0xff]
        %v411 = vld [vmem:[%s400 + $0x50] sm:$0xff]
        %v412 = vld [vmem:[%s400 + $0x58] sm:$0xff]
        %v413 = vld [vmem:[%s400 + $0x60] sm:$0xff]
        %v414 = vld [vmem:[%s400 + $0x68] sm:$0xff]
        %v415 = vld [vmem:[%s400 + $0x70] sm:$0xff]
        %v416 = vld [vmem:[%s400 + $0x78] sm:$0xff]
        %s417 = scalar_lea.vmem %s250, 128 [#allocation8]
        %v418 = vld [vmem:[%s417] sm:$0xff]
        %v419 = vld [vmem:[%s417 + $0x8] sm:$0xff]
        %v420 = vld [vmem:[%s417 + $0x10] sm:$0xff]
        %v421 = vld [vmem:[%s417 + $0x18] sm:$0xff]
        %v422 = vld [vmem:[%s417 + $0x20] sm:$0xff]
        %v423 = vld [vmem:[%s417 + $0x28] sm:$0xff]
        %v424 = vld [vmem:[%s417 + $0x30] sm:$0xff]
        %v425 = vld [vmem:[%s417 + $0x38] sm:$0xff]
        %v426 = vld [vmem:[%s417 + $0x40] sm:$0xff]
        %v427 = vld [vmem:[%s417 + $0x48] sm:$0xff]
        %v428 = vld [vmem:[%s417 + $0x50] sm:$0xff]
        %v429 = vld [vmem:[%s417 + $0x58] sm:$0xff]
        %v430 = vld [vmem:[%s417 + $0x60] sm:$0xff]
        %v431 = vld [vmem:[%s417 + $0x68] sm:$0xff]
        %v432 = vld [vmem:[%s417 + $0x70] sm:$0xff]
        %v433 = vld [vmem:[%s417 + $0x78] sm:$0xff]
        %v434 = vsub.f32 %v401, %v418
        %v435 = vsub.f32 %v402, %v419
        %v436 = vsub.f32 %v403, %v420
        %v437 = vsub.f32 %v404, %v421
        %v438 = vsub.f32 %v405, %v422
        %v439 = vsub.f32 %v406, %v423
        %v440 = vsub.f32 %v407, %v424
        %v441 = vsub.f32 %v408, %v425
        %v442 = vsub.f32 %v409, %v426
        %v443 = vsub.f32 %v410, %v427
        %v444 = vsub.f32 %v411, %v428
        %v445 = vsub.f32 %v412, %v429
        %v446 = vsub.f32 %v413, %v430
        %v447 = vsub.f32 %v414, %v431
        %v448 = vsub.f32 %v415, %v432
        %v449 = vsub.f32 %v416, %v433
        %v450 = vadd.f32 %v384, %v434
        %v451 = vadd.f32 %v385, %v435
        %v452 = vadd.f32 %v386, %v436
        %v453 = vadd.f32 %v387, %v437
        %v454 = vadd.f32 %v388, %v438
        %v455 = vadd.f32 %v389, %v439
        %v456 = vadd.f32 %v390, %v440
        %v457 = vadd.f32 %v391, %v441
        %v458 = vadd.f32 %v392, %v442
        %v459 = vadd.f32 %v393, %v443
        %v460 = vadd.f32 %v394, %v444
        %v461 = vadd.f32 %v395, %v445
        %v462 = vadd.f32 %v396, %v446
        %v463 = vadd.f32 %v397, %v447
        %v464 = vadd.f32 %v398, %v448
        %v465 = vadd.f32 %v399, %v449
        %s466 = scalar_lea.vmem %s241, 256 [#allocation7]
        %v467 = vld [vmem:[%s466] sm:$0xff]
        %v468 = vld [vmem:[%s466 + $0x8] sm:$0xff]
        %v469 = vld [vmem:[%s466 + $0x10] sm:$0xff]
        %v470 = vld [vmem:[%s466 + $0x18] sm:$0xff]
        %v471 = vld [vmem:[%s466 + $0x20] sm:$0xff]
        %v472 = vld [vmem:[%s466 + $0x28] sm:$0xff]
        %v473 = vld [vmem:[%s466 + $0x30] sm:$0xff]
        %v474 = vld [vmem:[%s466 + $0x38] sm:$0xff]
        %v475 = vld [vmem:[%s466 + $0x40] sm:$0xff]
        %v476 = vld [vmem:[%s466 + $0x48] sm:$0xff]
        %v477 = vld [vmem:[%s466 + $0x50] sm:$0xff]
        %v478 = vld [vmem:[%s466 + $0x58] sm:$0xff]
        %v479 = vld [vmem:[%s466 + $0x60] sm:$0xff]
        %v480 = vld [vmem:[%s466 + $0x68] sm:$0xff]
        %v481 = vld [vmem:[%s466 + $0x70] sm:$0xff]
        %v482 = vld [vmem:[%s466 + $0x78] sm:$0xff]
        %s483 = scalar_lea.vmem %s250, 256 [#allocation8]
        %v484 = vld [vmem:[%s483] sm:$0xff]
        %v485 = vld [vmem:[%s483 + $0x8] sm:$0xff]
        %v486 = vld [vmem:[%s483 + $0x10] sm:$0xff]
        %v487 = vld [vmem:[%s483 + $0x18] sm:$0xff]
        %v488 = vld [vmem:[%s483 + $0x20] sm:$0xff]
        %v489 = vld [vmem:[%s483 + $0x28] sm:$0xff]
        %v490 = vld [vmem:[%s483 + $0x30] sm:$0xff]
        %v491 = vld [vmem:[%s483 + $0x38] sm:$0xff]
        %v492 = vld [vmem:[%s483 + $0x40] sm:$0xff]
        %v493 = vld [vmem:[%s483 + $0x48] sm:$0xff]
        %v494 = vld [vmem:[%s483 + $0x50] sm:$0xff]
        %v495 = vld [vmem:[%s483 + $0x58] sm:$0xff]
        %v496 = vld [vmem:[%s483 + $0x60] sm:$0xff]
        %v497 = vld [vmem:[%s483 + $0x68] sm:$0xff]
        %v498 = vld [vmem:[%s483 + $0x70] sm:$0xff]
        %v499 = vld [vmem:[%s483 + $0x78] sm:$0xff]
        %v500 = vsub.f32 %v467, %v484
        %v501 = vsub.f32 %v468, %v485
        %v502 = vsub.f32 %v469, %v486
        %v503 = vsub.f32 %v470, %v487
        %v504 = vsub.f32 %v471, %v488
        %v505 = vsub.f32 %v472, %v489
        %v506 = vsub.f32 %v473, %v490
        %v507 = vsub.f32 %v474, %v491
        %v508 = vsub.f32 %v475, %v492
        %v509 = vsub.f32 %v476, %v493
        %v510 = vsub.f32 %v477, %v494
        %v511 = vsub.f32 %v478, %v495
        %v512 = vsub.f32 %v479, %v496
        %v513 = vsub.f32 %v480, %v497
        %v514 = vsub.f32 %v481, %v498
        %v515 = vsub.f32 %v482, %v499
        %v516 = vadd.f32 %v450, %v500
        %v517 = vadd.f32 %v451, %v501
        %v518 = vadd.f32 %v452, %v502
        %v519 = vadd.f32 %v453, %v503
        %v520 = vadd.f32 %v454, %v504
        %v521 = vadd.f32 %v455, %v505
        %v522 = vadd.f32 %v456, %v506
        %v523 = vadd.f32 %v457, %v507
        %v524 = vadd.f32 %v458, %v508
        %v525 = vadd.f32 %v459, %v509
        %v526 = vadd.f32 %v460, %v510
        %v527 = vadd.f32 %v461, %v511
        %v528 = vadd.f32 %v462, %v512
        %v529 = vadd.f32 %v463, %v513
        %v530 = vadd.f32 %v464, %v514
        %v531 = vadd.f32 %v465, %v515
        %vm532 = vcmask 261120
        %v534 = vsel %vm532, %v283, 0
        %536 = vmatprep.subr.mxu0 %v517
        %537 = vmatpush1.msra.mxu0 %v516
        %538 = vmatprep.subr.mxu0 %v521
        %539 = vmatpush1.msra.mxu0 %v520
        %540 = vmatprep.subr.mxu0 %v525
        %541 = vmatpush1.msra.mxu0 %v524
        %542 = vmatprep.subr.mxu0 %v529
        %543 = vmatpush1.msra.mxu0 %v528
        %544 = vmatprep.subr.mxu0 0.0
        %545 = vmatpush1.msra.mxu0 0.0
        %546 = vmatprep.subr.mxu0 0.0
        %547 = vmatpush1.msra.mxu0 0.0
        %548 = vmatprep.subr.mxu0 0.0
        %549 = vmatpush1.msra.mxu0 0.0
        %550 = vmatprep.subr.mxu0 0.0
        %551 = vmatpush1.msra.mxu0 0.0
        %552 = vmatprep.subr.mxu0 0.0
        %553 = vmatpush1.msra.mxu0 0.0
        %554 = vmatprep.subr.mxu0 0.0
        %555 = vmatpush1.msra.mxu0 0.0
        %556 = vmatprep.subr.mxu0 0.0
        %557 = vmatpush1.msra.mxu0 0.0
        %558 = vmatprep.subr.mxu0 0.0
        %559 = vmatpush1.msra.mxu0 0.0
        %560 = vmatprep.subr.mxu0 0.0
        %561 = vmatpush1.msra.mxu0 0.0
        %562 = vmatprep.subr.mxu0 0.0
        %563 = vmatpush1.msra.mxu0 0.0
        %564 = vmatprep.subr.mxu0 0.0
        %565 = vmatpush1.msra.mxu0 0.0
        %566 = vmatprep.subr.mxu0 0.0
        %567 = vmatpush1.msra.mxu0 0.0
        %568 = vmatprep.subr.mxu0 0.0
        %569 = vmatpush1.msra.mxu0 0.0
        %570 = vmatprep.subr.mxu0 0.0
        %571 = vmatpush1.msra.mxu0 0.0
        %572 = vmatprep.subr.mxu0 0.0
        %573 = vmatpush1.msra.mxu0 0.0
        %574 = vmatprep.subr.mxu0 0.0
        %575 = vmatpush1.msra.mxu0 0.0
        %576 = vmatprep.subr.mxu0 0.0
        %577 = vmatpush1.msra.mxu0 0.0
        %578 = vmatprep.subr.mxu0 0.0
        %579 = vmatpush1.msra.mxu0 0.0
        %580 = vmatprep.subr.mxu0 0.0
        %581 = vmatpush1.msra.mxu0 0.0
        %582 = vmatprep.subr.mxu0 0.0
        %583 = vmatpush1.msra.mxu0 0.0
        %584 = vmatprep.subr.mxu0 0.0
        %585 = vmatpush1.msra.mxu0 0.0
        %586 = vmatprep.subr.mxu0 0.0
        %587 = vmatpush1.msra.mxu0 0.0
        %588 = vmatprep.subr.mxu0 0.0
        %589 = vmatpush1.msra.mxu0 0.0
        %590 = vmatprep.subr.mxu0 0.0
        %591 = vmatpush1.msra.mxu0 0.0
        %592 = vmatprep.subr.mxu0 0.0
        %593 = vmatpush1.msra.mxu0 0.0
        %594 = vmatprep.subr.mxu0 0.0
        %595 = vmatpush1.msra.mxu0 0.0
        %596 = vmatprep.subr.mxu0 0.0
        %597 = vmatpush1.msra.mxu0 0.0
        %598 = vmatprep.subr.mxu0 0.0
        %599 = vmatpush1.msra.mxu0 0.0
        %600 = vmatprep.mubr.f32.mxu0 0.0
        %601 = vmatmul.mubr.f32.gmra.mrb[0].mxu0 %v534
        %v602 = vpop.f32.mrb[0].mxu0
        %v603 = vadd.f32 0.0, %v602
        %v604 = vpop.f32.mrb[0].mxu0
        %v605 = vadd.f32 0.0, %v604
        %606 = vdwg.mxu0
        %607 = vmatprep.subr.mxu0 %v519
        %608 = vmatpush1.msra.mxu0 %v518
        %609 = vmatprep.subr.mxu0 %v523
        %610 = vmatpush1.msra.mxu0 %v522
        %611 = vmatprep.subr.mxu0 %v527
        %612 = vmatpush1.msra.mxu0 %v526
        %613 = vmatprep.subr.mxu0 %v531
        %614 = vmatpush1.msra.mxu0 %v530
        %615 = vmatprep.subr.mxu0 0.0
        %616 = vmatpush1.msra.mxu0 0.0
        %617 = vmatprep.subr.mxu0 0.0
        %618 = vmatpush1.msra.mxu0 0.0
        %619 = vmatprep.subr.mxu0 0.0
        %620 = vmatpush1.msra.mxu0 0.0
        %621 = vmatprep.subr.mxu0 0.0
        %622 = vmatpush1.msra.mxu0 0.0
        %623 = vmatprep.subr.mxu0 0.0
        %624 = vmatpush1.msra.mxu0 0.0
        %625 = vmatprep.subr.mxu0 0.0
        %626 = vmatpush1.msra.mxu0 0.0
        %627 = vmatprep.subr.mxu0 0.0
        %628 = vmatpush1.msra.mxu0 0.0
        %629 = vmatprep.subr.mxu0 0.0
        %630 = vmatpush1.msra.mxu0 0.0
        %631 = vmatprep.subr.mxu0 0.0
        %632 = vmatpush1.msra.mxu0 0.0
        %633 = vmatprep.subr.mxu0 0.0
        %634 = vmatpush1.msra.mxu0 0.0
        %635 = vmatprep.subr.mxu0 0.0
        %636 = vmatpush1.msra.mxu0 0.0
        %637 = vmatprep.subr.mxu0 0.0
        %638 = vmatpush1.msra.mxu0 0.0
        %639 = vmatprep.subr.mxu0 0.0
        %640 = vmatpush1.msra.mxu0 0.0
        %641 = vmatprep.subr.mxu0 0.0
        %642 = vmatpush1.msra.mxu0 0.0
        %643 = vmatprep.subr.mxu0 0.0
        %644 = vmatpush1.msra.mxu0 0.0
        %645 = vmatprep.subr.mxu0 0.0
        %646 = vmatpush1.msra.mxu0 0.0
        %647 = vmatprep.subr.mxu0 0.0
        %648 = vmatpush1.msra.mxu0 0.0
        %649 = vmatprep.subr.mxu0 0.0
        %650 = vmatpush1.msra.mxu0 0.0
        %651 = vmatprep.subr.mxu0 0.0
        %652 = vmatpush1.msra.mxu0 0.0
        %653 = vmatprep.subr.mxu0 0.0
        %654 = vmatpush1.msra.mxu0 0.0
        %655 = vmatprep.subr.mxu0 0.0
        %656 = vmatpush1.msra.mxu0 0.0
        %657 = vmatprep.subr.mxu0 0.0
        %658 = vmatpush1.msra.mxu0 0.0
        %659 = vmatprep.subr.mxu0 0.0
        %660 = vmatpush1.msra.mxu0 0.0
        %661 = vmatprep.subr.mxu0 0.0
        %662 = vmatpush1.msra.mxu0 0.0
        %663 = vmatprep.subr.mxu0 0.0
        %664 = vmatpush1.msra.mxu0 0.0
        %665 = vmatprep.subr.mxu0 0.0
        %666 = vmatpush1.msra.mxu0 0.0
        %667 = vmatprep.subr.mxu0 0.0
        %668 = vmatpush1.msra.mxu0 0.0
        %669 = vmatprep.subr.mxu0 0.0
        %670 = vmatpush1.msra.mxu0 0.0
        %671 = vmatprep.mubr.f32.mxu0 0.0
        %672 = vmatmul.mubr.f32.gmra.mrb[0].mxu0 %v534
        %v673 = vpop.f32.mrb[0].mxu0
        %v674 = vadd.f32 0.0, %v673
        %v675 = vpop.f32.mrb[0].mxu0
        %v676 = vadd.f32 0.0, %v675
        %677 = vdwg.mxu0
        %678 = vmatprep.subr.mxu0 0.0
        %679 = vmatpush1.msra.mxu0 %v284
        %680 = vmatprep.subr.mxu0 0.0
        %681 = vmatpush1.msra.mxu0 %v285
        %682 = vmatprep.subr.mxu0 0.0
        %683 = vmatpush1.msra.mxu0 %v286
        %684 = vmatprep.subr.mxu0 0.0
        %685 = vmatpush1.msra.mxu0 %v287
        %686 = vmatprep.subr.mxu0 0.0
        %687 = vmatpush1.msra.mxu0 %v288
        %688 = vmatprep.subr.mxu0 0.0
        %689 = vmatpush1.msra.mxu0 %v289
        %690 = vmatprep.subr.mxu0 0.0
        %691 = vmatpush1.msra.mxu0 %v290
        %692 = vmatprep.subr.mxu0 0.0
        %693 = vmatpush1.msra.mxu0 %v291
        %694 = vmatprep.subr.mxu0 0.0
        %695 = vmatpush1.msra.mxu0 %v292
        %696 = vmatprep.subr.mxu0 0.0
        %697 = vmatpush1.msra.mxu0 %v293
        %698 = vmatprep.subr.mxu0 0.0
        %699 = vmatpush1.msra.mxu0 %v294
        %700 = vmatprep.subr.mxu0 0.0
        %701 = vmatpush1.msra.mxu0 %v295
        %702 = vmatprep.subr.mxu0 0.0
        %703 = vmatpush1.msra.mxu0 %v296
        %704 = vmatprep.subr.mxu0 0.0
        %705 = vmatpush1.msra.mxu0 %v297
        %706 = vmatprep.subr.mxu0 0.0
        %707 = vmatpush1.msra.mxu0 %v298
        %708 = vmatprep.subr.mxu0 0.0
        %709 = vmatpush1.msra.mxu0 %v299
        %710 = vmatprep.subr.mxu0 0.0
        %711 = vmatpush1.msra.mxu0 %v300
        %712 = vmatprep.subr.mxu0 0.0
        %713 = vmatpush1.msra.mxu0 %v301
        %714 = vmatprep.subr.mxu0 0.0
        %715 = vmatpush1.msra.mxu0 %v302
        %716 = vmatprep.subr.mxu0 0.0
        %717 = vmatpush1.msra.mxu0 %v303
        %718 = vmatprep.subr.mxu0 0.0
        %719 = vmatpush1.msra.mxu0 %v304
        %720 = vmatprep.subr.mxu0 0.0
        %721 = vmatpush1.msra.mxu0 %v305
        %722 = vmatprep.subr.mxu0 0.0
        %723 = vmatpush1.msra.mxu0 %v306
        %724 = vmatprep.subr.mxu0 0.0
        %725 = vmatpush1.msra.mxu0 %v307
        %726 = vmatprep.subr.mxu0 0.0
        %727 = vmatpush1.msra.mxu0 %v308
        %728 = vmatprep.subr.mxu0 0.0
        %729 = vmatpush1.msra.mxu0 %v309
        %730 = vmatprep.subr.mxu0 0.0
        %731 = vmatpush1.msra.mxu0 %v310
        %732 = vmatprep.subr.mxu0 0.0
        %733 = vmatpush1.msra.mxu0 %v311
        %734 = vmatprep.subr.mxu0 0.0
        %735 = vmatpush1.msra.mxu0 %v312
        %736 = vmatprep.subr.mxu0 0.0
        %737 = vmatpush1.msra.mxu0 %v313
        %738 = vmatprep.subr.mxu0 0.0
        %739 = vmatpush1.msra.mxu0 %v314
        %740 = vmatprep.subr.mxu0 0.0
        %741 = vmatpush1.msra.mxu0 %v315
        %742 = vmatprep.mubr.f32.mxu0 %v605
        %743 = vmatmul.mubr.f32.gmra.mrb[0].mxu0 %v603
        %v744 = vpop.f32.mrb[0].mxu0
        %v745 = vadd.f32 0.0, %v744
        %v746 = vpop.f32.mrb[0].mxu0
        %747 = vdwg.mxu0
        %748 = vmatprep.subr.mxu0 0.0
        %749 = vmatpush1.msra.mxu0 %v316
        %750 = vmatprep.subr.mxu0 0.0
        %751 = vmatpush1.msra.mxu0 %v317
        %752 = vmatprep.subr.mxu0 0.0
        %753 = vmatpush1.msra.mxu0 %v318
        %754 = vmatprep.subr.mxu0 0.0
        %755 = vmatpush1.msra.mxu0 %v319
        %756 = vmatprep.subr.mxu0 0.0
        %757 = vmatpush1.msra.mxu0 %v320
        %758 = vmatprep.subr.mxu0 0.0
        %759 = vmatpush1.msra.mxu0 %v321
        %760 = vmatprep.subr.mxu0 0.0
        %761 = vmatpush1.msra.mxu0 %v322
        %762 = vmatprep.subr.mxu0 0.0
        %763 = vmatpush1.msra.mxu0 %v323
        %764 = vmatprep.subr.mxu0 0.0
        %765 = vmatpush1.msra.mxu0 %v324
        %766 = vmatprep.subr.mxu0 0.0
        %767 = vmatpush1.msra.mxu0 %v325
        %768 = vmatprep.subr.mxu0 0.0
        %769 = vmatpush1.msra.mxu0 %v326
        %770 = vmatprep.subr.mxu0 0.0
        %771 = vmatpush1.msra.mxu0 %v327
        %772 = vmatprep.subr.mxu0 0.0
        %773 = vmatpush1.msra.mxu0 %v328
        %774 = vmatprep.subr.mxu0 0.0
        %775 = vmatpush1.msra.mxu0 %v329
        %776 = vmatprep.subr.mxu0 0.0
        %777 = vmatpush1.msra.mxu0 %v330
        %778 = vmatprep.subr.mxu0 0.0
        %779 = vmatpush1.msra.mxu0 %v331
        %780 = vmatprep.subr.mxu0 0.0
        %781 = vmatpush1.msra.mxu0 %v332
        %782 = vmatprep.subr.mxu0 0.0
        %783 = vmatpush1.msra.mxu0 %v333
        %784 = vmatprep.subr.mxu0 0.0
        %785 = vmatpush1.msra.mxu0 %v334
        %786 = vmatprep.subr.mxu0 0.0
        %787 = vmatpush1.msra.mxu0 %v335
        %788 = vmatprep.subr.mxu0 0.0
        %789 = vmatpush1.msra.mxu0 %v336
        %790 = vmatprep.subr.mxu0 0.0
        %791 = vmatpush1.msra.mxu0 %v337
        %792 = vmatprep.subr.mxu0 0.0
        %793 = vmatpush1.msra.mxu0 %v338
        %794 = vmatprep.subr.mxu0 0.0
        %795 = vmatpush1.msra.mxu0 %v339
        %796 = vmatprep.subr.mxu0 0.0
        %797 = vmatpush1.msra.mxu0 %v340
        %798 = vmatprep.subr.mxu0 0.0
        %799 = vmatpush1.msra.mxu0 %v341
        %800 = vmatprep.subr.mxu0 0.0
        %801 = vmatpush1.msra.mxu0 %v342
        %802 = vmatprep.subr.mxu0 0.0
        %803 = vmatpush1.msra.mxu0 %v343
        %804 = vmatprep.subr.mxu0 0.0
        %805 = vmatpush1.msra.mxu0 %v344
        %806 = vmatprep.subr.mxu0 0.0
        %807 = vmatpush1.msra.mxu0 %v345
        %808 = vmatprep.subr.mxu0 0.0
        %809 = vmatpush1.msra.mxu0 %v346
        %810 = vmatprep.subr.mxu0 0.0
        %811 = vmatpush1.msra.mxu0 %v347
        %812 = vmatprep.mubr.f32.mxu0 %v676
        %813 = vmatmul.mubr.f32.gmra.mrb[0].mxu0 %v674
        %v814 = vpop.f32.mrb[0].mxu0
        %v815 = vadd.f32 %v745, %v814
        %v816 = vpop.f32.mrb[0].mxu0
        %817 = vdwg.mxu0
        %v818 = vmul.f32 %v815, 0.020833334
        %vm819 = vcmp.eq.s32.totalorder %v349, 0
        %820 = vrot.lane.b32.xlu0 %v818, 1
        %v821 = vpop.permute.xlu0 %820
        %v822 = vsel %vm819, 0.0, %v821
        %vm823 = vcmp.eq.s32.totalorder %v349, 127
        %824 = vrot.lane.b32.xlu0 %v818, 127
        %v825 = vpop.permute.xlu0 %824
        %v826 = vsel %vm823, 0.0, %v825
        %vm827 = vcmp.eq.s32.totalorder %v351, 0
        %v828 = vrot.slane %v818, 7
        %v829 = vsel %vm827, 0.0, %v828
        %vm830 = vcmp.eq.s32.totalorder %v351, 7
        %v831 = vrot.slane %v818, 1
        %v832 = vsel %vm830, 0.0, %v831
        %v833 = vsub.f32 %v818, %v822
        %v834 = vsub.f32 %v818, %v826
        %v835 = vsub.f32 %v818, %v829
        %v836 = vsub.f32 %v818, %v832
        %v837 = vmul.f32 %v833, %v833
        %v838 = vmul.f32 %v834, %v834
        %v839 = vadd.f32 %v837, %v838
        %v840 = vmul.f32 %v835, %v835
        %v841 = vadd.f32 %v839, %v840
        %v842 = vmul.f32 %v836, %v836
        %v843 = vadd.f32 %v841, %v842
        %844 = vst [vmem:[%s279] sm:$0xff] %v843
        %s845 = scalar_lea.vmem %s241, 384 [#allocation7]
        %v846 = vld [vmem:[%s845] sm:$0xff]
        %v847 = vld [vmem:[%s845 + $0x8] sm:$0xff]
        %v848 = vld [vmem:[%s845 + $0x10] sm:$0xff]
        %v849 = vld [vmem:[%s845 + $0x18] sm:$0xff]
        %v850 = vld [vmem:[%s845 + $0x20] sm:$0xff]
        %v851 = vld [vmem:[%s845 + $0x28] sm:$0xff]
        %v852 = vld [vmem:[%s845 + $0x30] sm:$0xff]
        %v853 = vld [vmem:[%s845 + $0x38] sm:$0xff]
        %v854 = vld [vmem:[%s845 + $0x40] sm:$0xff]
        %v855 = vld [vmem:[%s845 + $0x48] sm:$0xff]
        %v856 = vld [vmem:[%s845 + $0x50] sm:$0xff]
        %v857 = vld [vmem:[%s845 + $0x58] sm:$0xff]
        %v858 = vld [vmem:[%s845 + $0x60] sm:$0xff]
        %v859 = vld [vmem:[%s845 + $0x68] sm:$0xff]
        %v860 = vld [vmem:[%s845 + $0x70] sm:$0xff]
        %v861 = vld [vmem:[%s845 + $0x78] sm:$0xff]
        %s862 = scalar_lea.vmem %s250, 384 [#allocation8]
        %v863 = vld [vmem:[%s862] sm:$0xff]
        %v864 = vld [vmem:[%s862 + $0x8] sm:$0xff]
        %v865 = vld [vmem:[%s862 + $0x10] sm:$0xff]
        %v866 = vld [vmem:[%s862 + $0x18] sm:$0xff]
        %v867 = vld [vmem:[%s862 + $0x20] sm:$0xff]
        %v868 = vld [vmem:[%s862 + $0x28] sm:$0xff]
        %v869 = vld [vmem:[%s862 + $0x30] sm:$0xff]
        %v870 = vld [vmem:[%s862 + $0x38] sm:$0xff]
        %v871 = vld [vmem:[%s862 + $0x40] sm:$0xff]
        %v872 = vld [vmem:[%s862 + $0x48] sm:$0xff]
        %v873 = vld [vmem:[%s862 + $0x50] sm:$0xff]
        %v874 = vld [vmem:[%s862 + $0x58] sm:$0xff]
        %v875 = vld [vmem:[%s862 + $0x60] sm:$0xff]
        %v876 = vld [vmem:[%s862 + $0x68] sm:$0xff]
        %v877 = vld [vmem:[%s862 + $0x70] sm:$0xff]
        %v878 = vld [vmem:[%s862 + $0x78] sm:$0xff]
        %v879 = vsub.f32 %v846, %v863
        %v880 = vsub.f32 %v847, %v864
        %v881 = vsub.f32 %v848, %v865
        %v882 = vsub.f32 %v849, %v866
        %v883 = vsub.f32 %v850, %v867
        %v884 = vsub.f32 %v851, %v868
        %v885 = vsub.f32 %v852, %v869
        %v886 = vsub.f32 %v853, %v870
        %v887 = vsub.f32 %v854, %v871
        %v888 = vsub.f32 %v855, %v872
        %v889 = vsub.f32 %v856, %v873
        %v890 = vsub.f32 %v857, %v874
        %v891 = vsub.f32 %v858, %v875
        %v892 = vsub.f32 %v859, %v876
        %v893 = vsub.f32 %v860, %v877
        %v894 = vsub.f32 %v861, %v878
        %s895 = scalar_lea.vmem %s241, 512 [#allocation7]
        %v896 = vld [vmem:[%s895] sm:$0xff]
        %v897 = vld [vmem:[%s895 + $0x8] sm:$0xff]
        %v898 = vld [vmem:[%s895 + $0x10] sm:$0xff]
        %v899 = vld [vmem:[%s895 + $0x18] sm:$0xff]
        %v900 = vld [vmem:[%s895 + $0x20] sm:$0xff]
        %v901 = vld [vmem:[%s895 + $0x28] sm:$0xff]
        %v902 = vld [vmem:[%s895 + $0x30] sm:$0xff]
        %v903 = vld [vmem:[%s895 + $0x38] sm:$0xff]
        %v904 = vld [vmem:[%s895 + $0x40] sm:$0xff]
        %v905 = vld [vmem:[%s895 + $0x48] sm:$0xff]
        %v906 = vld [vmem:[%s895 + $0x50] sm:$0xff]
        %v907 = vld [vmem:[%s895 + $0x58] sm:$0xff]
        %v908 = vld [vmem:[%s895 + $0x60] sm:$0xff]
        %v909 = vld [vmem:[%s895 + $0x68] sm:$0xff]
        %v910 = vld [vmem:[%s895 + $0x70] sm:$0xff]
        %v911 = vld [vmem:[%s895 + $0x78] sm:$0xff]
        %s912 = scalar_lea.vmem %s250, 512 [#allocation8]
        %v913 = vld [vmem:[%s912] sm:$0xff]
        %v914 = vld [vmem:[%s912 + $0x8] sm:$0xff]
        %v915 = vld [vmem:[%s912 + $0x10] sm:$0xff]
        %v916 = vld [vmem:[%s912 + $0x18] sm:$0xff]
        %v917 = vld [vmem:[%s912 + $0x20] sm:$0xff]
        %v918 = vld [vmem:[%s912 + $0x28] sm:$0xff]
        %v919 = vld [vmem:[%s912 + $0x30] sm:$0xff]
        %v920 = vld [vmem:[%s912 + $0x38] sm:$0xff]
        %v921 = vld [vmem:[%s912 + $0x40] sm:$0xff]
        %v922 = vld [vmem:[%s912 + $0x48] sm:$0xff]
        %v923 = vld [vmem:[%s912 + $0x50] sm:$0xff]
        %v924 = vld [vmem:[%s912 + $0x58] sm:$0xff]
        %v925 = vld [vmem:[%s912 + $0x60] sm:$0xff]
        %v926 = vld [vmem:[%s912 + $0x68] sm:$0xff]
        %v927 = vld [vmem:[%s912 + $0x70] sm:$0xff]
        %v928 = vld [vmem:[%s912 + $0x78] sm:$0xff]
        %v929 = vsub.f32 %v896, %v913
        %v930 = vsub.f32 %v897, %v914
        %v931 = vsub.f32 %v898, %v915
        %v932 = vsub.f32 %v899, %v916
        %v933 = vsub.f32 %v900, %v917
        %v934 = vsub.f32 %v901, %v918
        %v935 = vsub.f32 %v902, %v919
        %v936 = vsub.f32 %v903, %v920
        %v937 = vsub.f32 %v904, %v921
        %v938 = vsub.f32 %v905, %v922
        %v939 = vsub.f32 %v906, %v923
        %v940 = vsub.f32 %v907, %v924
        %v941 = vsub.f32 %v908, %v925
        %v942 = vsub.f32 %v909, %v926
        %v943 = vsub.f32 %v910, %v927
        %v944 = vsub.f32 %v911, %v928
        %v945 = vadd.f32 %v879, %v929
        %v946 = vadd.f32 %v880, %v930
        %v947 = vadd.f32 %v881, %v931
        %v948 = vadd.f32 %v882, %v932
        %v949 = vadd.f32 %v883, %v933
        %v950 = vadd.f32 %v884, %v934
        %v951 = vadd.f32 %v885, %v935
        %v952 = vadd.f32 %v886, %v936
        %v953 = vadd.f32 %v887, %v937
        %v954 = vadd.f32 %v888, %v938
        %v955 = vadd.f32 %v889, %v939
        %v956 = vadd.f32 %v890, %v940
        %v957 = vadd.f32 %v891, %v941
        %v958 = vadd.f32 %v892, %v942
        %v959 = vadd.f32 %v893, %v943
        %v960 = vadd.f32 %v894, %v944
        %s961 = scalar_lea.vmem %s241, 640 [#allocation7]
        %v962 = vld [vmem:[%s961] sm:$0xff]
        %v963 = vld [vmem:[%s961 + $0x8] sm:$0xff]
        %v964 = vld [vmem:[%s961 + $0x10] sm:$0xff]
        %v965 = vld [vmem:[%s961 + $0x18] sm:$0xff]
        %v966 = vld [vmem:[%s961 + $0x20] sm:$0xff]
        %v967 = vld [vmem:[%s961 + $0x28] sm:$0xff]
        %v968 = vld [vmem:[%s961 + $0x30] sm:$0xff]
        %v969 = vld [vmem:[%s961 + $0x38] sm:$0xff]
        %v970 = vld [vmem:[%s961 + $0x40] sm:$0xff]
        %v971 = vld [vmem:[%s961 + $0x48] sm:$0xff]
        %v972 = vld [vmem:[%s961 + $0x50] sm:$0xff]
        %v973 = vld [vmem:[%s961 + $0x58] sm:$0xff]
        %v974 = vld [vmem:[%s961 + $0x60] sm:$0xff]
        %v975 = vld [vmem:[%s961 + $0x68] sm:$0xff]
        %v976 = vld [vmem:[%s961 + $0x70] sm:$0xff]
        %v977 = vld [vmem:[%s961 + $0x78] sm:$0xff]
        %s978 = scalar_lea.vmem %s250, 640 [#allocation8]
        %v979 = vld [vmem:[%s978] sm:$0xff]
        %v980 = vld [vmem:[%s978 + $0x8] sm:$0xff]
        %v981 = vld [vmem:[%s978 + $0x10] sm:$0xff]
        %v982 = vld [vmem:[%s978 + $0x18] sm:$0xff]
        %v983 = vld [vmem:[%s978 + $0x20] sm:$0xff]
        %v984 = vld [vmem:[%s978 + $0x28] sm:$0xff]
        %v985 = vld [vmem:[%s978 + $0x30] sm:$0xff]
        %v986 = vld [vmem:[%s978 + $0x38] sm:$0xff]
        %v987 = vld [vmem:[%s978 + $0x40] sm:$0xff]
        %v988 = vld [vmem:[%s978 + $0x48] sm:$0xff]
        %v989 = vld [vmem:[%s978 + $0x50] sm:$0xff]
        %v990 = vld [vmem:[%s978 + $0x58] sm:$0xff]
        %v991 = vld [vmem:[%s978 + $0x60] sm:$0xff]
        %v992 = vld [vmem:[%s978 + $0x68] sm:$0xff]
        %v993 = vld [vmem:[%s978 + $0x70] sm:$0xff]
        %v994 = vld [vmem:[%s978 + $0x78] sm:$0xff]
        %v995 = vsub.f32 %v962, %v979
        %v996 = vsub.f32 %v963, %v980
        %v997 = vsub.f32 %v964, %v981
        %v998 = vsub.f32 %v965, %v982
        %v999 = vsub.f32 %v966, %v983
        %v1000 = vsub.f32 %v967, %v984
        %v1001 = vsub.f32 %v968, %v985
        %v1002 = vsub.f32 %v969, %v986
        %v1003 = vsub.f32 %v970, %v987
        %v1004 = vsub.f32 %v971, %v988
        %v1005 = vsub.f32 %v972, %v989
        %v1006 = vsub.f32 %v973, %v990
        %v1007 = vsub.f32 %v974, %v991
        %v1008 = vsub.f32 %v975, %v992
        %v1009 = vsub.f32 %v976, %v993
        %v1010 = vsub.f32 %v977, %v994
        %v1011 = vadd.f32 %v945, %v995
        %v1012 = vadd.f32 %v946, %v996
        %v1013 = vadd.f32 %v947, %v997
        %v1014 = vadd.f32 %v948, %v998
        %v1015 = vadd.f32 %v949, %v999
        %v1016 = vadd.f32 %v950, %v1000
        %v1017 = vadd.f32 %v951, %v1001
        %v1018 = vadd.f32 %v952, %v1002
        %v1019 = vadd.f32 %v953, %v1003
        %v1020 = vadd.f32 %v954, %v1004
        %v1021 = vadd.f32 %v955, %v1005
        %v1022 = vadd.f32 %v956, %v1006
        %v1023 = vadd.f32 %v957, %v1007
        %v1024 = vadd.f32 %v958, %v1008
        %v1025 = vadd.f32 %v959, %v1009
        %v1026 = vadd.f32 %v960, %v1010
        %1027 = vmatprep.subr.mxu0 %v1012
        %1028 = vmatpush1.msra.mxu0 %v1011
        %1029 = vmatprep.subr.mxu0 %v1016
        %1030 = vmatpush1.msra.mxu0 %v1015
        %1031 = vmatprep.subr.mxu0 %v1020
        %1032 = vmatpush1.msra.mxu0 %v1019
        %1033 = vmatprep.subr.mxu0 %v1024
        %1034 = vmatpush1.msra.mxu0 %v1023
        %1035 = vmatprep.subr.mxu0 0.0
        %1036 = vmatpush1.msra.mxu0 0.0
        %1037 = vmatprep.subr.mxu0 0.0
        %1038 = vmatpush1.msra.mxu0 0.0
        %1039 = vmatprep.subr.mxu0 0.0
        %1040 = vmatpush1.msra.mxu0 0.0
        %1041 = vmatprep.subr.mxu0 0.0
        %1042 = vmatpush1.msra.mxu0 0.0
        %1043 = vmatprep.subr.mxu0 0.0
        %1044 = vmatpush1.msra.mxu0 0.0
        %1045 = vmatprep.subr.mxu0 0.0
        %1046 = vmatpush1.msra.mxu0 0.0
        %1047 = vmatprep.subr.mxu0 0.0
        %1048 = vmatpush1.msra.mxu0 0.0
        %1049 = vmatprep.subr.mxu0 0.0
        %1050 = vmatpush1.msra.mxu0 0.0
        %1051 = vmatprep.subr.mxu0 0.0
        %1052 = vmatpush1.msra.mxu0 0.0
        %1053 = vmatprep.subr.mxu0 0.0
        %1054 = vmatpush1.msra.mxu0 0.0
        %1055 = vmatprep.subr.mxu0 0.0
        %1056 = vmatpush1.msra.mxu0 0.0
        %1057 = vmatprep.subr.mxu0 0.0
        %1058 = vmatpush1.msra.mxu0 0.0
        %1059 = vmatprep.subr.mxu0 0.0
        %1060 = vmatpush1.msra.mxu0 0.0
        %1061 = vmatprep.subr.mxu0 0.0
        %1062 = vmatpush1.msra.mxu0 0.0
        %1063 = vmatprep.subr.mxu0 0.0
        %1064 = vmatpush1.msra.mxu0 0.0
        %1065 = vmatprep.subr.mxu0 0.0
        %1066 = vmatpush1.msra.mxu0 0.0
        %1067 = vmatprep.subr.mxu0 0.0
        %1068 = vmatpush1.msra.mxu0 0.0
        %1069 = vmatprep.subr.mxu0 0.0
        %1070 = vmatpush1.msra.mxu0 0.0
        %1071 = vmatprep.subr.mxu0 0.0
        %1072 = vmatpush1.msra.mxu0 0.0
        %1073 = vmatprep.subr.mxu0 0.0
        %1074 = vmatpush1.msra.mxu0 0.0
        %1075 = vmatprep.subr.mxu0 0.0
        %1076 = vmatpush1.msra.mxu0 0.0
        %1077 = vmatprep.subr.mxu0 0.0
        %1078 = vmatpush1.msra.mxu0 0.0
        %1079 = vmatprep.subr.mxu0 0.0
        %1080 = vmatpush1.msra.mxu0 0.0
        %1081 = vmatprep.subr.mxu0 0.0
        %1082 = vmatpush1.msra.mxu0 0.0
        %1083 = vmatprep.subr.mxu0 0.0
        %1084 = vmatpush1.msra.mxu0 0.0
        %1085 = vmatprep.subr.mxu0 0.0
        %1086 = vmatpush1.msra.mxu0 0.0
        %1087 = vmatprep.subr.mxu0 0.0
        %1088 = vmatpush1.msra.mxu0 0.0
        %1089 = vmatprep.subr.mxu0 0.0
        %1090 = vmatpush1.msra.mxu0 0.0
        %1091 = vmatprep.mubr.f32.mxu0 0.0
        %1092 = vmatmul.mubr.f32.gmra.mrb[0].mxu0 %v534
        %v1093 = vpop.f32.mrb[0].mxu0
        %v1094 = vadd.f32 0.0, %v1093
        %v1095 = vpop.f32.mrb[0].mxu0
        %v1096 = vadd.f32 0.0, %v1095
        %1097 = vdwg.mxu0
        %1098 = vmatprep.subr.mxu0 %v1014
        %1099 = vmatpush1.msra.mxu0 %v1013
        %1100 = vmatprep.subr.mxu0 %v1018
        %1101 = vmatpush1.msra.mxu0 %v1017
        %1102 = vmatprep.subr.mxu0 %v1022
        %1103 = vmatpush1.msra.mxu0 %v1021
        %1104 = vmatprep.subr.mxu0 %v1026
        %1105 = vmatpush1.msra.mxu0 %v1025
        %1106 = vmatprep.subr.mxu0 0.0
        %1107 = vmatpush1.msra.mxu0 0.0
        %1108 = vmatprep.subr.mxu0 0.0
        %1109 = vmatpush1.msra.mxu0 0.0
        %1110 = vmatprep.subr.mxu0 0.0
        %1111 = vmatpush1.msra.mxu0 0.0
        %1112 = vmatprep.subr.mxu0 0.0
        %1113 = vmatpush1.msra.mxu0 0.0
        %1114 = vmatprep.subr.mxu0 0.0
        %1115 = vmatpush1.msra.mxu0 0.0
        %1116 = vmatprep.subr.mxu0 0.0
        %1117 = vmatpush1.msra.mxu0 0.0
        %1118 = vmatprep.subr.mxu0 0.0
        %1119 = vmatpush1.msra.mxu0 0.0
        %1120 = vmatprep.subr.mxu0 0.0
        %1121 = vmatpush1.msra.mxu0 0.0
        %1122 = vmatprep.subr.mxu0 0.0
        %1123 = vmatpush1.msra.mxu0 0.0
        %1124 = vmatprep.subr.mxu0 0.0
        %1125 = vmatpush1.msra.mxu0 0.0
        %1126 = vmatprep.subr.mxu0 0.0
        %1127 = vmatpush1.msra.mxu0 0.0
        %1128 = vmatprep.subr.mxu0 0.0
        %1129 = vmatpush1.msra.mxu0 0.0
        %1130 = vmatprep.subr.mxu0 0.0
        %1131 = vmatpush1.msra.mxu0 0.0
        %1132 = vmatprep.subr.mxu0 0.0
        %1133 = vmatpush1.msra.mxu0 0.0
        %1134 = vmatprep.subr.mxu0 0.0
        %1135 = vmatpush1.msra.mxu0 0.0
        %1136 = vmatprep.subr.mxu0 0.0
        %1137 = vmatpush1.msra.mxu0 0.0
        %1138 = vmatprep.subr.mxu0 0.0
        %1139 = vmatpush1.msra.mxu0 0.0
        %1140 = vmatprep.subr.mxu0 0.0
        %1141 = vmatpush1.msra.mxu0 0.0
        %1142 = vmatprep.subr.mxu0 0.0
        %1143 = vmatpush1.msra.mxu0 0.0
        %1144 = vmatprep.subr.mxu0 0.0
        %1145 = vmatpush1.msra.mxu0 0.0
        %1146 = vmatprep.subr.mxu0 0.0
        %1147 = vmatpush1.msra.mxu0 0.0
        %1148 = vmatprep.subr.mxu0 0.0
        %1149 = vmatpush1.msra.mxu0 0.0
        %1150 = vmatprep.subr.mxu0 0.0
        %1151 = vmatpush1.msra.mxu0 0.0
        %1152 = vmatprep.subr.mxu0 0.0
        %1153 = vmatpush1.msra.mxu0 0.0
        %1154 = vmatprep.subr.mxu0 0.0
        %1155 = vmatpush1.msra.mxu0 0.0
        %1156 = vmatprep.subr.mxu0 0.0
        %1157 = vmatpush1.msra.mxu0 0.0
        %1158 = vmatprep.subr.mxu0 0.0
        %1159 = vmatpush1.msra.mxu0 0.0
        %1160 = vmatprep.subr.mxu0 0.0
        %1161 = vmatpush1.msra.mxu0 0.0
        %1162 = vmatprep.mubr.f32.mxu0 0.0
        %1163 = vmatmul.mubr.f32.gmra.mrb[0].mxu0 %v534
        %v1164 = vpop.f32.mrb[0].mxu0
        %v1165 = vadd.f32 0.0, %v1164
        %v1166 = vpop.f32.mrb[0].mxu0
        %v1167 = vadd.f32 0.0, %v1166
        %1168 = vdwg.mxu0
        %1169 = vmatprep.subr.mxu0 0.0
        %1170 = vmatpush1.msra.mxu0 %v284
        %1171 = vmatprep.subr.mxu0 0.0
        %1172 = vmatpush1.msra.mxu0 %v285
        %1173 = vmatprep.subr.mxu0 0.0
        %1174 = vmatpush1.msra.mxu0 %v286
        %1175 = vmatprep.subr.mxu0 0.0
        %1176 = vmatpush1.msra.mxu0 %v287
        %1177 = vmatprep.subr.mxu0 0.0
        %1178 = vmatpush1.msra.mxu0 %v288
        %1179 = vmatprep.subr.mxu0 0.0
        %1180 = vmatpush1.msra.mxu0 %v289
        %1181 = vmatprep.subr.mxu0 0.0
        %1182 = vmatpush1.msra.mxu0 %v290
        %1183 = vmatprep.subr.mxu0 0.0
        %1184 = vmatpush1.msra.mxu0 %v291
        %1185 = vmatprep.subr.mxu0 0.0
        %1186 = vmatpush1.msra.mxu0 %v292
        %1187 = vmatprep.subr.mxu0 0.0
        %1188 = vmatpush1.msra.mxu0 %v293
        %1189 = vmatprep.subr.mxu0 0.0
        %1190 = vmatpush1.msra.mxu0 %v294
        %1191 = vmatprep.subr.mxu0 0.0
        %1192 = vmatpush1.msra.mxu0 %v295
        %1193 = vmatprep.subr.mxu0 0.0
        %1194 = vmatpush1.msra.mxu0 %v296
        %1195 = vmatprep.subr.mxu0 0.0
        %1196 = vmatpush1.msra.mxu0 %v297
        %1197 = vmatprep.subr.mxu0 0.0
        %1198 = vmatpush1.msra.mxu0 %v298
        %1199 = vmatprep.subr.mxu0 0.0
        %1200 = vmatpush1.msra.mxu0 %v299
        %1201 = vmatprep.subr.mxu0 0.0
        %1202 = vmatpush1.msra.mxu0 %v300
        %1203 = vmatprep.subr.mxu0 0.0
        %1204 = vmatpush1.msra.mxu0 %v301
        %1205 = vmatprep.subr.mxu0 0.0
        %1206 = vmatpush1.msra.mxu0 %v302
        %1207 = vmatprep.subr.mxu0 0.0
        %1208 = vmatpush1.msra.mxu0 %v303
        %1209 = vmatprep.subr.mxu0 0.0
        %1210 = vmatpush1.msra.mxu0 %v304
        %1211 = vmatprep.subr.mxu0 0.0
        %1212 = vmatpush1.msra.mxu0 %v305
        %1213 = vmatprep.subr.mxu0 0.0
        %1214 = vmatpush1.msra.mxu0 %v306
        %1215 = vmatprep.subr.mxu0 0.0
        %1216 = vmatpush1.msra.mxu0 %v307
        %1217 = vmatprep.subr.mxu0 0.0
        %1218 = vmatpush1.msra.mxu0 %v308
        %1219 = vmatprep.subr.mxu0 0.0
        %1220 = vmatpush1.msra.mxu0 %v309
        %1221 = vmatprep.subr.mxu0 0.0
        %1222 = vmatpush1.msra.mxu0 %v310
        %1223 = vmatprep.subr.mxu0 0.0
        %1224 = vmatpush1.msra.mxu0 %v311
        %1225 = vmatprep.subr.mxu0 0.0
        %1226 = vmatpush1.msra.mxu0 %v312
        %1227 = vmatprep.subr.mxu0 0.0
        %1228 = vmatpush1.msra.mxu0 %v313
        %1229 = vmatprep.subr.mxu0 0.0
        %1230 = vmatpush1.msra.mxu0 %v314
        %1231 = vmatprep.subr.mxu0 0.0
        %1232 = vmatpush1.msra.mxu0 %v315
        %1233 = vmatprep.mubr.f32.mxu0 %v1096
        %1234 = vmatmul.mubr.f32.gmra.mrb[0].mxu0 %v1094
        %v1235 = vpop.f32.mrb[0].mxu0
        %v1236 = vadd.f32 0.0, %v1235
        %v1237 = vpop.f32.mrb[0].mxu0
        %1238 = vdwg.mxu0
        %1239 = vmatprep.subr.mxu0 0.0
        %1240 = vmatpush1.msra.mxu0 %v316
        %1241 = vmatprep.subr.mxu0 0.0
        %1242 = vmatpush1.msra.mxu0 %v317
        %1243 = vmatprep.subr.mxu0 0.0
        %1244 = vmatpush1.msra.mxu0 %v318
        %1245 = vmatprep.subr.mxu0 0.0
        %1246 = vmatpush1.msra.mxu0 %v319
        %1247 = vmatprep.subr.mxu0 0.0
        %1248 = vmatpush1.msra.mxu0 %v320
        %1249 = vmatprep.subr.mxu0 0.0
        %1250 = vmatpush1.msra.mxu0 %v321
        %1251 = vmatprep.subr.mxu0 0.0
        %1252 = vmatpush1.msra.mxu0 %v322
        %1253 = vmatprep.subr.mxu0 0.0
        %1254 = vmatpush1.msra.mxu0 %v323
        %1255 = vmatprep.subr.mxu0 0.0
        %1256 = vmatpush1.msra.mxu0 %v324
        %1257 = vmatprep.subr.mxu0 0.0
        %1258 = vmatpush1.msra.mxu0 %v325
        %1259 = vmatprep.subr.mxu0 0.0
        %1260 = vmatpush1.msra.mxu0 %v326
        %1261 = vmatprep.subr.mxu0 0.0
        %1262 = vmatpush1.msra.mxu0 %v327
        %1263 = vmatprep.subr.mxu0 0.0
        %1264 = vmatpush1.msra.mxu0 %v328
        %1265 = vmatprep.subr.mxu0 0.0
        %1266 = vmatpush1.msra.mxu0 %v329
        %1267 = vmatprep.subr.mxu0 0.0
        %1268 = vmatpush1.msra.mxu0 %v330
        %1269 = vmatprep.subr.mxu0 0.0
        %1270 = vmatpush1.msra.mxu0 %v331
        %1271 = vmatprep.subr.mxu0 0.0
        %1272 = vmatpush1.msra.mxu0 %v332
        %1273 = vmatprep.subr.mxu0 0.0
        %1274 = vmatpush1.msra.mxu0 %v333
        %1275 = vmatprep.subr.mxu0 0.0
        %1276 = vmatpush1.msra.mxu0 %v334
        %1277 = vmatprep.subr.mxu0 0.0
        %1278 = vmatpush1.msra.mxu0 %v335
        %1279 = vmatprep.subr.mxu0 0.0
        %1280 = vmatpush1.msra.mxu0 %v336
        %1281 = vmatprep.subr.mxu0 0.0
        %1282 = vmatpush1.msra.mxu0 %v337
        %1283 = vmatprep.subr.mxu0 0.0
        %1284 = vmatpush1.msra.mxu0 %v338
        %1285 = vmatprep.subr.mxu0 0.0
        %1286 = vmatpush1.msra.mxu0 %v339
        %1287 = vmatprep.subr.mxu0 0.0
        %1288 = vmatpush1.msra.mxu0 %v340
        %1289 = vmatprep.subr.mxu0 0.0
        %1290 = vmatpush1.msra.mxu0 %v341
        %1291 = vmatprep.subr.mxu0 0.0
        %1292 = vmatpush1.msra.mxu0 %v342
        %1293 = vmatprep.subr.mxu0 0.0
        %1294 = vmatpush1.msra.mxu0 %v343
        %1295 = vmatprep.subr.mxu0 0.0
        %1296 = vmatpush1.msra.mxu0 %v344
        %1297 = vmatprep.subr.mxu0 0.0
        %1298 = vmatpush1.msra.mxu0 %v345
        %1299 = vmatprep.subr.mxu0 0.0
        %1300 = vmatpush1.msra.mxu0 %v346
        %1301 = vmatprep.subr.mxu0 0.0
        %1302 = vmatpush1.msra.mxu0 %v347
        %1303 = vmatprep.mubr.f32.mxu0 %v1167
        %1304 = vmatmul.mubr.f32.gmra.mrb[0].mxu0 %v1165
        %v1305 = vpop.f32.mrb[0].mxu0
        %v1306 = vadd.f32 %v1236, %v1305
        %v1307 = vpop.f32.mrb[0].mxu0
        %1308 = vdwg.mxu0
        %v1309 = vmul.f32 %v1306, 0.020833334
        %1310 = vrot.lane.b32.xlu0 %v1309, 1
        %v1311 = vpop.permute.xlu0 %1310
        %v1312 = vsel %vm819, 0.0, %v1311
        %1313 = vrot.lane.b32.xlu0 %v1309, 127
        %v1314 = vpop.permute.xlu0 %1313
        %v1315 = vsel %vm823, 0.0, %v1314
        %v1316 = vrot.slane %v1309, 7
        %v1317 = vsel %vm827, 0.0, %v1316
        %v1318 = vrot.slane %v1309, 1
        %v1319 = vsel %vm830, 0.0, %v1318
        %v1320 = vsub.f32 %v1309, %v1312
        %v1321 = vsub.f32 %v1309, %v1315
        %v1322 = vsub.f32 %v1309, %v1317
        %v1323 = vsub.f32 %v1309, %v1319
        %v1324 = vmul.f32 %v1320, %v1320
        %v1325 = vmul.f32 %v1321, %v1321
        %v1326 = vadd.f32 %v1324, %v1325
        %v1327 = vmul.f32 %v1322, %v1322
        %v1328 = vadd.f32 %v1326, %v1327
        %v1329 = vmul.f32 %v1323, %v1323
        %v1330 = vadd.f32 %v1328, %v1329
        %s1331 = scalar_lea.vmem %s279, 8 [#allocation9]
        %1332 = vst [vmem:[%s1331] sm:$0xff] %v1330
        %s1333 = sand.u32 %s122, 1
        %s1334 = scalar_lea.sflag [#allocation4], %s1333
        %s1335 = sand.u32 %s122, 1
        %s1336 = smul.addr %s1335, 16
        %s1337 = scalar_lea.vmem [#allocation9], %s1336
        // Predicated region
        $region53: #{tpu_custom_call.1} parent=35 // pred_check
          %p1338 = pneg %p132
        $region54: #{tpu_custom_call.1} parent=35 // pred_check_branch
          %1340 = sbr.rel (%p1338) target = $region56
        $region55: #{tpu_custom_call.1} parent=35 // pred_region
          %s1341 = smul.u32 2, %s20
          %s1343 = ssub.s32 256, 256
          %1344 = vsyncadd %s1334, %s1343
          %s1345 = smul.addr %s1341, 128
          %s1346 = scalar_lea.hbm %s4, %s1345
          %s1347 = sshll.u32 %s1337, 4
          %s1348 = int_to_ptr.vmem [resolvable:$true] %s1347
          %1353 = dma.vmem_to_hbm [thread:$0]  %s1348, 256, %s1346, %s1334, 128, 128, 8
        $region56: #{tpu_custom_call.1} parent=35 // pred_fallthru
          _
      $region36: #{tpu_custom_call.1} parent=5 // pred_fallthru
        _
      %p1354 = scmp.le.s32.totalorder 2, %s15
      // Predicated region
      $region57: #{tpu_custom_call.1} parent=5 // pred_check
        %p1355 = pneg %p1354
      $region58: #{tpu_custom_call.1} parent=5 // pred_check_branch
        %1357 = sbr.rel (%p1355) target = $region60
      $region59: #{tpu_custom_call.1} parent=5 // pred_region
        %s1358 = ssub.s32 %s15, 2
        // Predicated region
        $region61: #{tpu_custom_call.1} parent=59 // pred_check
          %p1359 = pneg %p138
        $region62: #{tpu_custom_call.1} parent=59 // pred_check_branch
          %1361 = sbr.rel (%p1359) target = $region64
        $region63: #{tpu_custom_call.1} parent=59 // pred_region
          %s1362 = sand.u32 %s123, 1
          %s1363 = scalar_lea.sflag [#allocation4], %s1362
          %s1364 = sand.u32 %s123, 1
          %s1365 = smul.addr %s1364, 16
          %s1366 = scalar_lea.vmem [#allocation9], %s1365
          %1367 = dma.done %s1363, 256
        $region64: #{tpu_custom_call.1} parent=59 // pred_fallthru
          _
      $region60: #{tpu_custom_call.1} parent=5 // pred_fallthru
        _
    $region6: #{tpu_custom_call.1} parent=1 // loop_footer
      %s19 = sadd.s32 1, %s15
    $region7: #{tpu_custom_call.1} parent=1 // loop_footer_branch
      %14 = sbr.rel target = $region3
    $region8: #{tpu_custom_call.1} parent=1 // loop_exit
      _
    %1368 = vsyncpa [#allocation3], 1
    %s1369 = scalar_lea.sflag [#allocation3], 1
    %1370 = vsyncpa %s1369, 1
    %1371 = vsyncpa [#allocation6], 1
    %1372 = vsyncpa [#allocation4], 1
    %s1373 = scalar_lea.sflag [#allocation4], 1
    %1374 = vsyncpa %s1373, 1

</llo_original>
